<compile_context>
chip_gen: v7x
topology: tpu7x:2x2x1
jax: 0.10.0
libtpu: 0.0.40
codegen_flags: <defaults>
</compile_context>

<pallas_src>
import jax
import jax.numpy as jnp
from jax import lax
from jax.experimental import pallas as pl
from jax.experimental.pallas import tpu as pltpu

_NEG_INF = float("-inf")


# ----------------------------------------------------------------------------
# Fused SPPF kernel factory (H, W, channel sizes are static, closed over).
# ----------------------------------------------------------------------------
def _make_sppf_kernel(H, W, ch, c2):
    M = H * W
    # Source offsets of the 8 separable 5-tap shifts: W direction (+-1, +-2 within a
    # row), then H direction (+-W, +-2W, i.e. +-1/+-2 rows).
    srcs = (1, 2, -1, -2, W, 2 * W, -W, -2 * W)
    # Lane-roll amounts such that (under jnp.roll semantics) rolled[i] == a[i + src].
    amounts = tuple((-s) % M for s in srcs)

    def kernel(pos_ref, x_ref, w1_ref, b1_ref, w2_ref, b2_ref, o_ref):
        f32 = jnp.float32
        bf16 = jnp.bfloat16

        def silu(z):
            # exp and the approximate reciprocal both land on the EUP slot.
            return z * pl.reciprocal(1.0 + jnp.exp(-z), approx=True)

        # ---------- boundary masks for the separable 5x5 max pools (hoisted) ----------
        # Derived by rolling the position ids with the SAME amounts as the data, so the
        # masks are consistent with whatever the hardware rotation does, including the
        # wrap-around positions.  Built and broadcast to (C_, M) once, reused by all
        # three pools (no per-op re-broadcast).
        pos = pos_ref[...]                                     # (2, M) int32: [flat, row]
        idx, row = pos[0:1, :], pos[1:2, :]
        masks = []
        for t, amt in enumerate(amounts):
            rpos = pltpu.roll(pos, amt, axis=1)
            delta = rpos[0:1, :] - idx
            if t < 4:   # W direction: source must stay in the same image row, |d| in {1,2}
                ok = (rpos[1:2, :] == row) & (jnp.abs(delta) <= 2) & (delta != 0)
            else:       # H direction: |d| in {W, 2W} (same column is implied)
                ad = jnp.abs(delta)
                ok = (ad == W) | (ad == 2 * W)
            addm = jnp.where(ok, 0.0, _NEG_INF).astype(f32)    # (1, M) additive mask
            masks.append(jnp.broadcast_to(addm, (ch, M)))      # hoisted broadcast

        # -------------------- cv1: 1x1 conv (BN folded) + SiLU ------------------------
        # Input block is NCHW-flat (C1, M); weight is pre-transposed to (C_, C1), so this
        # is a plain MXU matmul with the spatial dim M on the lane axis.
        x = x_ref[0].astype(bf16)                                        # (C1, M)
        z = jnp.dot(w1_ref[...], x, preferred_element_type=f32)          # (C_, M)
        x1 = silu(z + b1_ref[...])                                       # (C_, M) f32

        def pool5(a):
            """5x5, stride-1, 'same' (-inf padded) max pool; separable XLU lane rolls."""
            r = a                                          # 5-tap along W (+-1, +-2 lanes)
            for t in range(4):
                r = jnp.maximum(r, pltpu.roll(a, amounts[t], axis=1) + masks[t])
            c = r                                          # 5-tap along H (+-W, +-2W lanes)
            for t in range(4, 8):
                c = jnp.maximum(c, pltpu.roll(r, amounts[t], axis=1) + masks[t])
            return c

        def cv2_dot(y, i):
            # (C2, C_) @ (C_, M) -> (C2, M): plain matmul, output is already NCHW-flat.
            return jnp.dot(w2_ref[i], y.astype(bf16), preferred_element_type=f32)

        # ------ cv2: concat-free 4-way accumulation, interleaved with the pool chain ----
        # Each dot is issued as soon as its operand exists so the MXU time overlaps the
        # VPU/XLU pool passes instead of serializing at the end.
        acc = cv2_dot(x1, 0)
        y1 = pool5(x1)
        acc = acc + cv2_dot(y1, 1)
        y2 = pool5(y1)
        acc = acc + cv2_dot(y2, 2)
        y3 = pool5(y2)
        acc = acc + cv2_dot(y3, 3)

        o_ref[0] = silu(acc + b2_ref[...]).astype(o_ref.dtype)           # (C2, M)

    return kernel


# ----------------------------------------------------------------------------
# BN folding and the public forward (NCHW in / NCHW out, matching PyTorch).
# ----------------------------------------------------------------------------
def fold_bn(gamma, beta, mean, var, eps=1e-5):
    s = gamma / jnp.sqrt(var + eps)
    return s, beta - mean * s


@jax.jit
def sppf_forward(x_nchw, params):
    n, c1, h, w = x_nchw.shape
    m = h * w

    s1, b1 = fold_bn(params["bn1_gamma"], params["bn1_beta"],
                     params["bn1_mean"], params["bn1_var"])
    s2, b2 = fold_bn(params["bn2_gamma"], params["bn2_beta"],
                     params["bn2_mean"], params["bn2_var"])

    # Fold BN scales into the 1x1-conv weights, pre-transpose them so every in-kernel
    # matmul is a plain (no-transpose) MXU op, and feed the MXU bf16 operands.
    w1t = (params["w1"] * s1[None, :]).T.astype(jnp.bfloat16)            # (C_, C1)
    ch = w1t.shape[0]
    w2f = params["w2"] * s2[None, :]                                     # (4*C_, C2)
    c2 = w2f.shape[1]
    w2t = jnp.transpose(w2f.reshape(4, ch, c2), (0, 2, 1)).astype(jnp.bfloat16)  # (4, C2, C_)
    b1f = b1.reshape(ch, 1).astype(jnp.float32)
    b2f = b2.reshape(c2, 1).astype(jnp.float32)

    # NCHW-flat views only: NO full-tensor transposes around the kernel.
    x = x_nchw.reshape(n, c1, m)
    idx = jnp.arange(m, dtype=jnp.int32)
    pos = jnp.stack([idx, idx // w], axis=0)                             # (2, M): flat, row

    kernel = _make_sppf_kernel(h, w, ch, c2)
    out = pl.pallas_call(
        kernel,
        out_shape=jax.ShapeDtypeStruct((n, c2, m), x_nchw.dtype),
        grid=(n,),
        in_specs=[
            pl.BlockSpec((2, m), lambda b: (0, 0)),                      # position ids
            pl.BlockSpec((1, c1, m), lambda b: (b, 0, 0)),               # x, NCHW-flat
            pl.BlockSpec((ch, c1), lambda b: (0, 0)),                    # cv1 weight (bf16)
            pl.BlockSpec((ch, 1), lambda b: (0, 0)),                     # cv1 bias
            pl.BlockSpec((4, c2, ch), lambda b: (0, 0, 0)),              # cv2 weights (bf16)
            pl.BlockSpec((c2, 1), lambda b: (0, 0)),                     # cv2 bias
        ],
        out_specs=pl.BlockSpec((1, c2, m), lambda b: (b, 0, 0)),         # NCHW-flat output
        compiler_params=pltpu.CompilerParams(
            dimension_semantics=("parallel",),
            vmem_limit_bytes=32 * 1024 * 1024),
    )(pos, x, w1t, b1f, w2t, b2f)

    return out.reshape(n, c2, h, w)


# ----------------------------------------------------------------------------
# Pure-JAX reference for verification (no Pallas).
# ----------------------------------------------------------------------------
def _ref_pw(x, w, s, b):
    y = jnp.einsum("nhwc,cd->nhwd", x, w) * s + b
    return y * jax.nn.sigmoid(y)


def _ref_pool(x):
    return lax.reduce_window(x, -jnp.inf, lax.max,
                             window_dimensions=(1, 5, 5, 1),
                             window_strides=(1, 1, 1, 1),
                             padding=((0, 0), (2, 2), (2, 2), (0, 0)))


def sppf_reference(x_nchw, params):
    x = jnp.transpose(x_nchw, (0, 2, 3, 1))
    s1, b1 = fold_bn(params["bn1_gamma"], params["bn1_beta"],
                     params["bn1_mean"], params["bn1_var"])
    s2, b2 = fold_bn(params["bn2_gamma"], params["bn2_beta"],
                     params["bn2_mean"], params["bn2_var"])
    x1 = _ref_pw(x, params["w1"], s1, b1)
    y1 = _ref_pool(x1)
    y2 = _ref_pool(y1)
    y3 = _ref_pool(y2)
    out = _ref_pw(jnp.concatenate([x1, y1, y2, y3], axis=-1), params["w2"], s2, b2)
    return jnp.transpose(out, (0, 3, 1, 2))


if __name__ == "__main__":
    # Small shapes consistent with the module: N=2, c1=4, c2=8, H=W=16, k=5.
    N, C1, C2, H, W = 2, 4, 8, 16, 16
    C_ = C1 // 2  # cv1 hidden channels

    key = jax.random.PRNGKey(0)
    ks = jax.random.split(key, 11)
    x = jax.random.normal(ks[0], (N, C1, H, W), dtype=jnp.float32)

    params = {
        # conv weights stored as (Cin, Cout) (equivalent to PyTorch (Cout, Cin, 1, 1)^T).
        "w1": 0.1 * jax.random.normal(ks[1], (C1, C_), dtype=jnp.float32),
        "bn1_gamma": jax.random.uniform(ks[2], (C_,), minval=0.5, maxval=1.5),
        "bn1_beta": 0.1 * jax.random.normal(ks[3], (C_,)),
        "bn1_mean": 0.1 * jax.random.normal(ks[4], (C_,)),
        "bn1_var": jax.random.uniform(ks[5], (C_,), minval=0.5, maxval=1.5),
        "w2": 0.1 * jax.random.normal(ks[6], (4 * C_, C2), dtype=jnp.float32),
        "bn2_gamma": jax.random.uniform(ks[7], (C2,), minval=0.5, maxval=1.5),
        "bn2_beta": 0.1 * jax.random.normal(ks[8], (C2,)),
        "bn2_mean": 0.1 * jax.random.normal(ks[9], (C2,)),
        "bn2_var": jax.random.uniform(ks[10], (C2,), minval=0.5, maxval=1.5),
    }

    out = jax.block_until_ready(sppf_forward(x, params))
    assert out.shape == (N, C2, H, W), out.shape

    ref = jax.block_until_ready(sppf_reference(x, params))
    err = float(jnp.max(jnp.abs(out - ref)))
    # bf16 MXU operands + EUP approx reciprocal in SiLU -> looser-than-f32 tolerance.
    assert err < 5e-2, f"max abs error {err}"

    print("KERNEL_OK")
</pallas_src>

<mosaic_0001>
module attributes {stable_mosaic.version = 11 : i64} {
  func.func @kernel(%arg0: i32, %arg1: memref<2x256xi32, #tpu.memory_space<vmem>>, %arg2: memref<1x4x256xf32, #tpu.memory_space<vmem>>, %arg3: memref<2x4xbf16, #tpu.memory_space<vmem>>, %arg4: memref<2x1xf32, #tpu.memory_space<vmem>>, %arg5: memref<4x8x2xbf16, #tpu.memory_space<vmem>>, %arg6: memref<8x1xf32, #tpu.memory_space<vmem>>, %arg7: memref<1x8x256xf32, #tpu.memory_space<vmem>>) attributes {dimension_semantics = [#tpu.dimension_semantics<parallel>], iteration_bounds = array<i64: 2>, scalar_prefetch = 0 : i64, scratch_operands = 0 : i64, tpu.core_type = #tpu.core_type<tc>, window_params = [{pipeline_mode = #tpu.pipeline_mode<synchronous>, transform_indices = @transform_0, window_bounds = array<i64: 2, 256>}, {transform_indices = @transform_1, window_bounds = array<i64: 1, 4, 256>}, {pipeline_mode = #tpu.pipeline_mode<synchronous>, transform_indices = @transform_2, window_bounds = array<i64: 2, 4>}, {pipeline_mode = #tpu.pipeline_mode<synchronous>, transform_indices = @transform_3, window_bounds = array<i64: 2, 1>}, {pipeline_mode = #tpu.pipeline_mode<synchronous>, transform_indices = @transform_4, window_bounds = array<i64: 4, 8, 2>}, {pipeline_mode = #tpu.pipeline_mode<synchronous>, transform_indices = @transform_5, window_bounds = array<i64: 8, 1>}, {transform_indices = @transform_6, window_bounds = array<i64: 1, 8, 256>}]} {
    %c0 = arith.constant 0 : index
    %c0_0 = arith.constant 0 : index
    %0 = vector.load %arg1[%c0, %c0_0] : memref<2x256xi32, #tpu.memory_space<vmem>>, vector<2x256xi32>
    %1 = vector.extract_strided_slice %0 {offsets = [0, 0], sizes = [1, 256], strides = [1, 1]} : vector<2x256xi32> to vector<1x256xi32>
    %2 = vector.extract_strided_slice %0 {offsets = [1, 0], sizes = [1, 256], strides = [1, 1]} : vector<2x256xi32> to vector<1x256xi32>
    %c255_i32 = arith.constant 255 : i32
    %3 = tpu.dynamic_rotate %0 by %c255_i32 dim 1 : vector<2x256xi32>, i32 -> vector<2x256xi32>
    %4 = vector.extract_strided_slice %3 {offsets = [0, 0], sizes = [1, 256], strides = [1, 1]} : vector<2x256xi32> to vector<1x256xi32>
    %5 = arith.subi %4, %1 : vector<1x256xi32>
    %6 = vector.extract_strided_slice %3 {offsets = [1, 0], sizes = [1, 256], strides = [1, 1]} : vector<2x256xi32> to vector<1x256xi32>
    %7 = arith.cmpi eq, %6, %2 : vector<1x256xi32>
    %8 = math.absi %5 : vector<1x256xi32>
    %c2_i32 = arith.constant 2 : i32
    %9 = vector.broadcast %c2_i32 : i32 to vector<1x256xi32>
    %10 = arith.cmpi sle, %8, %9 : vector<1x256xi32>
    %11 = arith.andi %7, %10 : vector<1x256xi1>
    %c0_i32 = arith.constant 0 : i32
    %12 = vector.broadcast %c0_i32 : i32 to vector<1x256xi32>
    %13 = arith.cmpi ne, %5, %12 : vector<1x256xi32>
    %14 = arith.andi %11, %13 : vector<1x256xi1>
    %cst = arith.constant 0.000000e+00 : f32
    %cst_1 = arith.constant 0xFF800000 : f32
    %15 = vector.broadcast %cst : f32 to vector<1x256xf32>
    %16 = vector.broadcast %cst_1 : f32 to vector<1x256xf32>
    %17 = arith.select %14, %15, %16 : vector<1x256xi1>, vector<1x256xf32>
    %18 = vector.shape_cast %17 : vector<1x256xf32> to vector<1x256xf32>
    %19 = vector.broadcast %18 : vector<1x256xf32> to vector<2x256xf32>
    %c254_i32 = arith.constant 254 : i32
    %20 = tpu.dynamic_rotate %0 by %c254_i32 dim 1 : vector<2x256xi32>, i32 -> vector<2x256xi32>
    %21 = vector.extract_strided_slice %20 {offsets = [0, 0], sizes = [1, 256], strides = [1, 1]} : vector<2x256xi32> to vector<1x256xi32>
    %22 = arith.subi %21, %1 : vector<1x256xi32>
    %23 = vector.extract_strided_slice %20 {offsets = [1, 0], sizes = [1, 256], strides = [1, 1]} : vector<2x256xi32> to vector<1x256xi32>
    %24 = arith.cmpi eq, %23, %2 : vector<1x256xi32>
    %25 = math.absi %22 : vector<1x256xi32>
    %c2_i32_2 = arith.constant 2 : i32
    %26 = vector.broadcast %c2_i32_2 : i32 to vector<1x256xi32>
    %27 = arith.cmpi sle, %25, %26 : vector<1x256xi32>
    %28 = arith.andi %24, %27 : vector<1x256xi1>
    %c0_i32_3 = arith.constant 0 : i32
    %29 = vector.broadcast %c0_i32_3 : i32 to vector<1x256xi32>
    %30 = arith.cmpi ne, %22, %29 : vector<1x256xi32>
    %31 = arith.andi %28, %30 : vector<1x256xi1>
    %cst_4 = arith.constant 0.000000e+00 : f32
    %cst_5 = arith.constant 0xFF800000 : f32
    %32 = vector.broadcast %cst_4 : f32 to vector<1x256xf32>
    %33 = vector.broadcast %cst_5 : f32 to vector<1x256xf32>
    %34 = arith.select %31, %32, %33 : vector<1x256xi1>, vector<1x256xf32>
    %35 = vector.shape_cast %34 : vector<1x256xf32> to vector<1x256xf32>
    %36 = vector.broadcast %35 : vector<1x256xf32> to vector<2x256xf32>
    %c1_i32 = arith.constant 1 : i32
    %37 = tpu.dynamic_rotate %0 by %c1_i32 dim 1 : vector<2x256xi32>, i32 -> vector<2x256xi32>
    %38 = vector.extract_strided_slice %37 {offsets = [0, 0], sizes = [1, 256], strides = [1, 1]} : vector<2x256xi32> to vector<1x256xi32>
    %39 = arith.subi %38, %1 : vector<1x256xi32>
    %40 = vector.extract_strided_slice %37 {offsets = [1, 0], sizes = [1, 256], strides = [1, 1]} : vector<2x256xi32> to vector<1x256xi32>
    %41 = arith.cmpi eq, %40, %2 : vector<1x256xi32>
    %42 = math.absi %39 : vector<1x256xi32>
    %c2_i32_6 = arith.constant 2 : i32
    %43 = vector.broadcast %c2_i32_6 : i32 to vector<1x256xi32>
    %44 = arith.cmpi sle, %42, %43 : vector<1x256xi32>
    %45 = arith.andi %41, %44 : vector<1x256xi1>
    %c0_i32_7 = arith.constant 0 : i32
    %46 = vector.broadcast %c0_i32_7 : i32 to vector<1x256xi32>
    %47 = arith.cmpi ne, %39, %46 : vector<1x256xi32>
    %48 = arith.andi %45, %47 : vector<1x256xi1>
    %cst_8 = arith.constant 0.000000e+00 : f32
    %cst_9 = arith.constant 0xFF800000 : f32
    %49 = vector.broadcast %cst_8 : f32 to vector<1x256xf32>
    %50 = vector.broadcast %cst_9 : f32 to vector<1x256xf32>
    %51 = arith.select %48, %49, %50 : vector<1x256xi1>, vector<1x256xf32>
    %52 = vector.shape_cast %51 : vector<1x256xf32> to vector<1x256xf32>
    %53 = vector.broadcast %52 : vector<1x256xf32> to vector<2x256xf32>
    %c2_i32_10 = arith.constant 2 : i32
    %54 = tpu.dynamic_rotate %0 by %c2_i32_10 dim 1 : vector<2x256xi32>, i32 -> vector<2x256xi32>
    %55 = vector.extract_strided_slice %54 {offsets = [0, 0], sizes = [1, 256], strides = [1, 1]} : vector<2x256xi32> to vector<1x256xi32>
    %56 = arith.subi %55, %1 : vector<1x256xi32>
    %57 = vector.extract_strided_slice %54 {offsets = [1, 0], sizes = [1, 256], strides = [1, 1]} : vector<2x256xi32> to vector<1x256xi32>
    %58 = arith.cmpi eq, %57, %2 : vector<1x256xi32>
    %59 = math.absi %56 : vector<1x256xi32>
    %c2_i32_11 = arith.constant 2 : i32
    %60 = vector.broadcast %c2_i32_11 : i32 to vector<1x256xi32>
    %61 = arith.cmpi sle, %59, %60 : vector<1x256xi32>
    %62 = arith.andi %58, %61 : vector<1x256xi1>
    %c0_i32_12 = arith.constant 0 : i32
    %63 = vector.broadcast %c0_i32_12 : i32 to vector<1x256xi32>
    %64 = arith.cmpi ne, %56, %63 : vector<1x256xi32>
    %65 = arith.andi %62, %64 : vector<1x256xi1>
    %cst_13 = arith.constant 0.000000e+00 : f32
    %cst_14 = arith.constant 0xFF800000 : f32
    %66 = vector.broadcast %cst_13 : f32 to vector<1x256xf32>
    %67 = vector.broadcast %cst_14 : f32 to vector<1x256xf32>
    %68 = arith.select %65, %66, %67 : vector<1x256xi1>, vector<1x256xf32>
    %69 = vector.shape_cast %68 : vector<1x256xf32> to vector<1x256xf32>
    %70 = vector.broadcast %69 : vector<1x256xf32> to vector<2x256xf32>
    %c240_i32 = arith.constant 240 : i32
    %71 = tpu.dynamic_rotate %0 by %c240_i32 dim 1 : vector<2x256xi32>, i32 -> vector<2x256xi32>
    %72 = vector.extract_strided_slice %71 {offsets = [0, 0], sizes = [1, 256], strides = [1, 1]} : vector<2x256xi32> to vector<1x256xi32>
    %73 = arith.subi %72, %1 : vector<1x256xi32>
    %74 = math.absi %73 : vector<1x256xi32>
    %c16_i32 = arith.constant 16 : i32
    %75 = vector.broadcast %c16_i32 : i32 to vector<1x256xi32>
    %76 = arith.cmpi eq, %74, %75 : vector<1x256xi32>
    %c32_i32 = arith.constant 32 : i32
    %77 = vector.broadcast %c32_i32 : i32 to vector<1x256xi32>
    %78 = arith.cmpi eq, %74, %77 : vector<1x256xi32>
    %79 = arith.ori %76, %78 : vector<1x256xi1>
    %cst_15 = arith.constant 0.000000e+00 : f32
    %cst_16 = arith.constant 0xFF800000 : f32
    %80 = vector.broadcast %cst_15 : f32 to vector<1x256xf32>
    %81 = vector.broadcast %cst_16 : f32 to vector<1x256xf32>
    %82 = arith.select %79, %80, %81 : vector<1x256xi1>, vector<1x256xf32>
    %83 = vector.shape_cast %82 : vector<1x256xf32> to vector<1x256xf32>
    %84 = vector.broadcast %83 : vector<1x256xf32> to vector<2x256xf32>
    %c224_i32 = arith.constant 224 : i32
    %85 = tpu.dynamic_rotate %0 by %c224_i32 dim 1 : vector<2x256xi32>, i32 -> vector<2x256xi32>
    %86 = vector.extract_strided_slice %85 {offsets = [0, 0], sizes = [1, 256], strides = [1, 1]} : vector<2x256xi32> to vector<1x256xi32>
    %87 = arith.subi %86, %1 : vector<1x256xi32>
    %88 = math.absi %87 : vector<1x256xi32>
    %c16_i32_17 = arith.constant 16 : i32
    %89 = vector.broadcast %c16_i32_17 : i32 to vector<1x256xi32>
    %90 = arith.cmpi eq, %88, %89 : vector<1x256xi32>
    %c32_i32_18 = arith.constant 32 : i32
    %91 = vector.broadcast %c32_i32_18 : i32 to vector<1x256xi32>
    %92 = arith.cmpi eq, %88, %91 : vector<1x256xi32>
    %93 = arith.ori %90, %92 : vector<1x256xi1>
    %cst_19 = arith.constant 0.000000e+00 : f32
    %cst_20 = arith.constant 0xFF800000 : f32
    %94 = vector.broadcast %cst_19 : f32 to vector<1x256xf32>
    %95 = vector.broadcast %cst_20 : f32 to vector<1x256xf32>
    %96 = arith.select %93, %94, %95 : vector<1x256xi1>, vector<1x256xf32>
    %97 = vector.shape_cast %96 : vector<1x256xf32> to vector<1x256xf32>
    %98 = vector.broadcast %97 : vector<1x256xf32> to vector<2x256xf32>
    %c16_i32_21 = arith.constant 16 : i32
    %99 = tpu.dynamic_rotate %0 by %c16_i32_21 dim 1 : vector<2x256xi32>, i32 -> vector<2x256xi32>
    %100 = vector.extract_strided_slice %99 {offsets = [0, 0], sizes = [1, 256], strides = [1, 1]} : vector<2x256xi32> to vector<1x256xi32>
    %101 = arith.subi %100, %1 : vector<1x256xi32>
    %102 = math.absi %101 : vector<1x256xi32>
    %c16_i32_22 = arith.constant 16 : i32
    %103 = vector.broadcast %c16_i32_22 : i32 to vector<1x256xi32>
    %104 = arith.cmpi eq, %102, %103 : vector<1x256xi32>
    %c32_i32_23 = arith.constant 32 : i32
    %105 = vector.broadcast %c32_i32_23 : i32 to vector<1x256xi32>
    %106 = arith.cmpi eq, %102, %105 : vector<1x256xi32>
    %107 = arith.ori %104, %106 : vector<1x256xi1>
    %cst_24 = arith.constant 0.000000e+00 : f32
    %cst_25 = arith.constant 0xFF800000 : f32
    %108 = vector.broadcast %cst_24 : f32 to vector<1x256xf32>
    %109 = vector.broadcast %cst_25 : f32 to vector<1x256xf32>
    %110 = arith.select %107, %108, %109 : vector<1x256xi1>, vector<1x256xf32>
    %111 = vector.shape_cast %110 : vector<1x256xf32> to vector<1x256xf32>
    %112 = vector.broadcast %111 : vector<1x256xf32> to vector<2x256xf32>
    %c32_i32_26 = arith.constant 32 : i32
    %113 = tpu.dynamic_rotate %0 by %c32_i32_26 dim 1 : vector<2x256xi32>, i32 -> vector<2x256xi32>
    %114 = vector.extract_strided_slice %113 {offsets = [0, 0], sizes = [1, 256], strides = [1, 1]} : vector<2x256xi32> to vector<1x256xi32>
    %115 = arith.subi %114, %1 : vector<1x256xi32>
    %116 = math.absi %115 : vector<1x256xi32>
    %c16_i32_27 = arith.constant 16 : i32
    %117 = vector.broadcast %c16_i32_27 : i32 to vector<1x256xi32>
    %118 = arith.cmpi eq, %116, %117 : vector<1x256xi32>
    %c32_i32_28 = arith.constant 32 : i32
    %119 = vector.broadcast %c32_i32_28 : i32 to vector<1x256xi32>
    %120 = arith.cmpi eq, %116, %119 : vector<1x256xi32>
    %121 = arith.ori %118, %120 : vector<1x256xi1>
    %cst_29 = arith.constant 0.000000e+00 : f32
    %cst_30 = arith.constant 0xFF800000 : f32
    %122 = vector.broadcast %cst_29 : f32 to vector<1x256xf32>
    %123 = vector.broadcast %cst_30 : f32 to vector<1x256xf32>
    %124 = arith.select %121, %122, %123 : vector<1x256xi1>, vector<1x256xf32>
    %125 = vector.shape_cast %124 : vector<1x256xf32> to vector<1x256xf32>
    %126 = vector.broadcast %125 : vector<1x256xf32> to vector<2x256xf32>
    %c0_31 = arith.constant 0 : index
    %c0_32 = arith.constant 0 : index
    %c0_33 = arith.constant 0 : index
    %127 = vector.load %arg2[%c0_31, %c0_32, %c0_33] : memref<1x4x256xf32, #tpu.memory_space<vmem>>, vector<1x4x256xf32>
    %128 = vector.shape_cast %127 : vector<1x4x256xf32> to vector<4x256xf32>
    %129 = arith.truncf %128 : vector<4x256xf32> to vector<4x256xbf16>
    %c0_34 = arith.constant 0 : index
    %c0_35 = arith.constant 0 : index
    %130 = vector.load %arg3[%c0_34, %c0_35] : memref<2x4xbf16, #tpu.memory_space<vmem>>, vector<2x4xbf16>
    %cst_36 = arith.constant dense<0.000000e+00> : vector<2x256xf32>
    %131 = tpu.matmul %130, %129, %cst_36 {dimension_numbers = #tpu.dot_dimension_numbers<[1], [0], [0], [1], [0, 0, 1, 1], [], []>} : vector<2x4xbf16>, vector<4x256xbf16>, vector<2x256xf32> -> vector<2x256xf32>
    %c0_37 = arith.constant 0 : index
    %c0_38 = arith.constant 0 : index
    %132 = vector.load %arg4[%c0_37, %c0_38] : memref<2x1xf32, #tpu.memory_space<vmem>>, vector<2x1xf32>
    %133 = vector.broadcast %132 : vector<2x1xf32> to vector<2x256xf32>
    %134 = arith.addf %131, %133 : vector<2x256xf32>
    %cst_39 = arith.constant 0.000000e+00 : f32
    %135 = vector.broadcast %cst_39 : f32 to vector<2x256xf32>
    %136 = arith.subf %135, %134 : vector<2x256xf32>
    %137 = math.exp %136 : vector<2x256xf32>
    %cst_40 = arith.constant 1.000000e+00 : f32
    %138 = vector.broadcast %cst_40 : f32 to vector<2x256xf32>
    %139 = arith.addf %138, %137 : vector<2x256xf32>
    %140 = tpu.reciprocal %139 {approx = true} : vector<2x256xf32> -> vector<2x256xf32>
    %141 = arith.mulf %134, %140 : vector<2x256xf32>
    %c0_41 = arith.constant 0 : index
    %c0_42 = arith.constant 0 : index
    %c0_43 = arith.constant 0 : index
    %142 = vector.load %arg5[%c0_41, %c0_42, %c0_43] : memref<4x8x2xbf16, #tpu.memory_space<vmem>>, vector<1x8x2xbf16>
    %143 = vector.shape_cast %142 : vector<1x8x2xbf16> to vector<8x2xbf16>
    %144 = arith.truncf %141 : vector<2x256xf32> to vector<2x256xbf16>
    %cst_44 = arith.constant dense<0.000000e+00> : vector<8x256xf32>
    %145 = tpu.matmul %143, %144, %cst_44 {dimension_numbers = #tpu.dot_dimension_numbers<[1], [0], [0], [1], [0, 0, 1, 1], [], []>} : vector<8x2xbf16>, vector<2x256xbf16>, vector<8x256xf32> -> vector<8x256xf32>
    %c255_i32_45 = arith.constant 255 : i32
    %146 = tpu.dynamic_rotate %141 by %c255_i32_45 dim 1 : vector<2x256xf32>, i32 -> vector<2x256xf32>
    %147 = arith.addf %146, %19 : vector<2x256xf32>
    %148 = arith.maximumf %141, %147 : vector<2x256xf32>
    %c254_i32_46 = arith.constant 254 : i32
    %149 = tpu.dynamic_rotate %141 by %c254_i32_46 dim 1 : vector<2x256xf32>, i32 -> vector<2x256xf32>
    %150 = arith.addf %149, %36 : vector<2x256xf32>
    %151 = arith.maximumf %148, %150 : vector<2x256xf32>
    %c1_i32_47 = arith.constant 1 : i32
    %152 = tpu.dynamic_rotate %141 by %c1_i32_47 dim 1 : vector<2x256xf32>, i32 -> vector<2x256xf32>
    %153 = arith.addf %152, %53 : vector<2x256xf32>
    %154 = arith.maximumf %151, %153 : vector<2x256xf32>
    %c2_i32_48 = arith.constant 2 : i32
    %155 = tpu.dynamic_rotate %141 by %c2_i32_48 dim 1 : vector<2x256xf32>, i32 -> vector<2x256xf32>
    %156 = arith.addf %155, %70 : vector<2x256xf32>
    %157 = arith.maximumf %154, %156 : vector<2x256xf32>
    %c240_i32_49 = arith.constant 240 : i32
    %158 = tpu.dynamic_rotate %157 by %c240_i32_49 dim 1 : vector<2x256xf32>, i32 -> vector<2x256xf32>
    %159 = arith.addf %158, %84 : vector<2x256xf32>
    %160 = arith.maximumf %157, %159 : vector<2x256xf32>
    %c224_i32_50 = arith.constant 224 : i32
    %161 = tpu.dynamic_rotate %157 by %c224_i32_50 dim 1 : vector<2x256xf32>, i32 -> vector<2x256xf32>
    %162 = arith.addf %161, %98 : vector<2x256xf32>
    %163 = arith.maximumf %160, %162 : vector<2x256xf32>
    %c16_i32_51 = arith.constant 16 : i32
    %164 = tpu.dynamic_rotate %157 by %c16_i32_51 dim 1 : vector<2x256xf32>, i32 -> vector<2x256xf32>
    %165 = arith.addf %164, %112 : vector<2x256xf32>
    %166 = arith.maximumf %163, %165 : vector<2x256xf32>
    %c32_i32_52 = arith.constant 32 : i32
    %167 = tpu.dynamic_rotate %157 by %c32_i32_52 dim 1 : vector<2x256xf32>, i32 -> vector<2x256xf32>
    %168 = arith.addf %167, %126 : vector<2x256xf32>
    %169 = arith.maximumf %166, %168 : vector<2x256xf32>
    %c1 = arith.constant 1 : index
    %c0_53 = arith.constant 0 : index
    %c0_54 = arith.constant 0 : index
    %170 = vector.load %arg5[%c1, %c0_53, %c0_54] : memref<4x8x2xbf16, #tpu.memory_space<vmem>>, vector<1x8x2xbf16>
    %171 = vector.shape_cast %170 : vector<1x8x2xbf16> to vector<8x2xbf16>
    %172 = arith.truncf %169 : vector<2x256xf32> to vector<2x256xbf16>
    %cst_55 = arith.constant dense<0.000000e+00> : vector<8x256xf32>
    %173 = tpu.matmul %171, %172, %cst_55 {dimension_numbers = #tpu.dot_dimension_numbers<[1], [0], [0], [1], [0, 0, 1, 1], [], []>} : vector<8x2xbf16>, vector<2x256xbf16>, vector<8x256xf32> -> vector<8x256xf32>
    %174 = arith.addf %145, %173 : vector<8x256xf32>
    %c255_i32_56 = arith.constant 255 : i32
    %175 = tpu.dynamic_rotate %169 by %c255_i32_56 dim 1 : vector<2x256xf32>, i32 -> vector<2x256xf32>
    %176 = arith.addf %175, %19 : vector<2x256xf32>
    %177 = arith.maximumf %169, %176 : vector<2x256xf32>
    %c254_i32_57 = arith.constant 254 : i32
    %178 = tpu.dynamic_rotate %169 by %c254_i32_57 dim 1 : vector<2x256xf32>, i32 -> vector<2x256xf32>
    %179 = arith.addf %178, %36 : vector<2x256xf32>
    %180 = arith.maximumf %177, %179 : vector<2x256xf32>
    %c1_i32_58 = arith.constant 1 : i32
    %181 = tpu.dynamic_rotate %169 by %c1_i32_58 dim 1 : vector<2x256xf32>, i32 -> vector<2x256xf32>
    %182 = arith.addf %181, %53 : vector<2x256xf32>
    %183 = arith.maximumf %180, %182 : vector<2x256xf32>
    %c2_i32_59 = arith.constant 2 : i32
    %184 = tpu.dynamic_rotate %169 by %c2_i32_59 dim 1 : vector<2x256xf32>, i32 -> vector<2x256xf32>
    %185 = arith.addf %184, %70 : vector<2x256xf32>
    %186 = arith.maximumf %183, %185 : vector<2x256xf32>
    %c240_i32_60 = arith.constant 240 : i32
    %187 = tpu.dynamic_rotate %186 by %c240_i32_60 dim 1 : vector<2x256xf32>, i32 -> vector<2x256xf32>
    %188 = arith.addf %187, %84 : vector<2x256xf32>
    %189 = arith.maximumf %186, %188 : vector<2x256xf32>
    %c224_i32_61 = arith.constant 224 : i32
    %190 = tpu.dynamic_rotate %186 by %c224_i32_61 dim 1 : vector<2x256xf32>, i32 -> vector<2x256xf32>
    %191 = arith.addf %190, %98 : vector<2x256xf32>
    %192 = arith.maximumf %189, %191 : vector<2x256xf32>
    %c16_i32_62 = arith.constant 16 : i32
    %193 = tpu.dynamic_rotate %186 by %c16_i32_62 dim 1 : vector<2x256xf32>, i32 -> vector<2x256xf32>
    %194 = arith.addf %193, %112 : vector<2x256xf32>
    %195 = arith.maximumf %192, %194 : vector<2x256xf32>
    %c32_i32_63 = arith.constant 32 : i32
    %196 = tpu.dynamic_rotate %186 by %c32_i32_63 dim 1 : vector<2x256xf32>, i32 -> vector<2x256xf32>
    %197 = arith.addf %196, %126 : vector<2x256xf32>
    %198 = arith.maximumf %195, %197 : vector<2x256xf32>
    %c2 = arith.constant 2 : index
    %c0_64 = arith.constant 0 : index
    %c0_65 = arith.constant 0 : index
    %199 = vector.load %arg5[%c2, %c0_64, %c0_65] : memref<4x8x2xbf16, #tpu.memory_space<vmem>>, vector<1x8x2xbf16>
    %200 = vector.shape_cast %199 : vector<1x8x2xbf16> to vector<8x2xbf16>
    %201 = arith.truncf %198 : vector<2x256xf32> to vector<2x256xbf16>
    %cst_66 = arith.constant dense<0.000000e+00> : vector<8x256xf32>
    %202 = tpu.matmul %200, %201, %cst_66 {dimension_numbers = #tpu.dot_dimension_numbers<[1], [0], [0], [1], [0, 0, 1, 1], [], []>} : vector<8x2xbf16>, vector<2x256xbf16>, vector<8x256xf32> -> vector<8x256xf32>
    %203 = arith.addf %174, %202 : vector<8x256xf32>
    %c255_i32_67 = arith.constant 255 : i32
    %204 = tpu.dynamic_rotate %198 by %c255_i32_67 dim 1 : vector<2x256xf32>, i32 -> vector<2x256xf32>
    %205 = arith.addf %204, %19 : vector<2x256xf32>
    %206 = arith.maximumf %198, %205 : vector<2x256xf32>
    %c254_i32_68 = arith.constant 254 : i32
    %207 = tpu.dynamic_rotate %198 by %c254_i32_68 dim 1 : vector<2x256xf32>, i32 -> vector<2x256xf32>
    %208 = arith.addf %207, %36 : vector<2x256xf32>
    %209 = arith.maximumf %206, %208 : vector<2x256xf32>
    %c1_i32_69 = arith.constant 1 : i32
    %210 = tpu.dynamic_rotate %198 by %c1_i32_69 dim 1 : vector<2x256xf32>, i32 -> vector<2x256xf32>
    %211 = arith.addf %210, %53 : vector<2x256xf32>
    %212 = arith.maximumf %209, %211 : vector<2x256xf32>
    %c2_i32_70 = arith.constant 2 : i32
    %213 = tpu.dynamic_rotate %198 by %c2_i32_70 dim 1 : vector<2x256xf32>, i32 -> vector<2x256xf32>
    %214 = arith.addf %213, %70 : vector<2x256xf32>
    %215 = arith.maximumf %212, %214 : vector<2x256xf32>
    %c240_i32_71 = arith.constant 240 : i32
    %216 = tpu.dynamic_rotate %215 by %c240_i32_71 dim 1 : vector<2x256xf32>, i32 -> vector<2x256xf32>
    %217 = arith.addf %216, %84 : vector<2x256xf32>
    %218 = arith.maximumf %215, %217 : vector<2x256xf32>
    %c224_i32_72 = arith.constant 224 : i32
    %219 = tpu.dynamic_rotate %215 by %c224_i32_72 dim 1 : vector<2x256xf32>, i32 -> vector<2x256xf32>
    %220 = arith.addf %219, %98 : vector<2x256xf32>
    %221 = arith.maximumf %218, %220 : vector<2x256xf32>
    %c16_i32_73 = arith.constant 16 : i32
    %222 = tpu.dynamic_rotate %215 by %c16_i32_73 dim 1 : vector<2x256xf32>, i32 -> vector<2x256xf32>
    %223 = arith.addf %222, %112 : vector<2x256xf32>
    %224 = arith.maximumf %221, %223 : vector<2x256xf32>
    %c32_i32_74 = arith.constant 32 : i32
    %225 = tpu.dynamic_rotate %215 by %c32_i32_74 dim 1 : vector<2x256xf32>, i32 -> vector<2x256xf32>
    %226 = arith.addf %225, %126 : vector<2x256xf32>
    %227 = arith.maximumf %224, %226 : vector<2x256xf32>
    %c3 = arith.constant 3 : index
    %c0_75 = arith.constant 0 : index
    %c0_76 = arith.constant 0 : index
    %228 = vector.load %arg5[%c3, %c0_75, %c0_76] : memref<4x8x2xbf16, #tpu.memory_space<vmem>>, vector<1x8x2xbf16>
    %229 = vector.shape_cast %228 : vector<1x8x2xbf16> to vector<8x2xbf16>
    %230 = arith.truncf %227 : vector<2x256xf32> to vector<2x256xbf16>
    %cst_77 = arith.constant dense<0.000000e+00> : vector<8x256xf32>
    %231 = tpu.matmul %229, %230, %cst_77 {dimension_numbers = #tpu.dot_dimension_numbers<[1], [0], [0], [1], [0, 0, 1, 1], [], []>} : vector<8x2xbf16>, vector<2x256xbf16>, vector<8x256xf32> -> vector<8x256xf32>
    %232 = arith.addf %203, %231 : vector<8x256xf32>
    %c0_78 = arith.constant 0 : index
    %c0_79 = arith.constant 0 : index
    %233 = vector.load %arg6[%c0_78, %c0_79] : memref<8x1xf32, #tpu.memory_space<vmem>>, vector<8x1xf32>
    %234 = vector.broadcast %233 : vector<8x1xf32> to vector<8x256xf32>
    %235 = arith.addf %232, %234 : vector<8x256xf32>
    %cst_80 = arith.constant 0.000000e+00 : f32
    %236 = vector.broadcast %cst_80 : f32 to vector<8x256xf32>
    %237 = arith.subf %236, %235 : vector<8x256xf32>
    %238 = math.exp %237 : vector<8x256xf32>
    %cst_81 = arith.constant 1.000000e+00 : f32
    %239 = vector.broadcast %cst_81 : f32 to vector<8x256xf32>
    %240 = arith.addf %239, %238 : vector<8x256xf32>
    %241 = tpu.reciprocal %240 {approx = true} : vector<8x256xf32> -> vector<8x256xf32>
    %242 = arith.mulf %235, %241 : vector<8x256xf32>
    %c0_82 = arith.constant 0 : index
    %c0_83 = arith.constant 0 : index
    %c0_84 = arith.constant 0 : index
    %243 = vector.load %arg7[%c0_82, %c0_83, %c0_84] : memref<1x8x256xf32, #tpu.memory_space<vmem>>, vector<1x8x256xf32>
    %244 = vector.shape_cast %243 : vector<1x8x256xf32> to vector<8x256xf32>
    %245 = vector.shape_cast %242 : vector<8x256xf32> to vector<1x8x256xf32>
    tpu.vector_store %arg7[%c0_82, %c0_83, %c0_84], %245 {strides = array<i32>} : memref<1x8x256xf32, #tpu.memory_space<vmem>>, vector<1x8x256xf32>,
    return
  }
  func.func @transform_0(%arg0: i32) -> (i32, i32) {
    %c0_i32 = arith.constant 0 : i32
    %c0_i32_0 = arith.constant 0 : i32
    %c0_i32_1 = arith.constant 0 : i32
    return %c0_i32, %c0_i32_0 : i32, i32
  }
  func.func @transform_1(%arg0: i32) -> (i32, i32, i32) {
    %c0_i32 = arith.constant 0 : i32
    %c0_i32_0 = arith.constant 0 : i32
    %c0_i32_1 = arith.constant 0 : i32
    return %arg0, %c0_i32, %c0_i32_0 : i32, i32, i32
  }
  func.func @transform_2(%arg0: i32) -> (i32, i32) {
    %c0_i32 = arith.constant 0 : i32
    %c0_i32_0 = arith.constant 0 : i32
    %c0_i32_1 = arith.constant 0 : i32
    return %c0_i32, %c0_i32_0 : i32, i32
  }
  func.func @transform_3(%arg0: i32) -> (i32, i32) {
    %c0_i32 = arith.constant 0 : i32
    %c0_i32_0 = arith.constant 0 : i32
    %c0_i32_1 = arith.constant 0 : i32
    return %c0_i32, %c0_i32_0 : i32, i32
  }
  func.func @transform_4(%arg0: i32) -> (i32, i32, i32) {
    %c0_i32 = arith.constant 0 : i32
    %c0_i32_0 = arith.constant 0 : i32
    %c0_i32_1 = arith.constant 0 : i32
    %c0_i32_2 = arith.constant 0 : i32
    return %c0_i32, %c0_i32_0, %c0_i32_1 : i32, i32, i32
  }
  func.func @transform_5(%arg0: i32) -> (i32, i32) {
    %c0_i32 = arith.constant 0 : i32
    %c0_i32_0 = arith.constant 0 : i32
    %c0_i32_1 = arith.constant 0 : i32
    return %c0_i32, %c0_i32_0 : i32, i32
  }
  func.func @transform_6(%arg0: i32) -> (i32, i32, i32) {
    %c0_i32 = arith.constant 0 : i32
    %c0_i32_0 = arith.constant 0 : i32
    %c0_i32_1 = arith.constant 0 : i32
    return %arg0, %c0_i32, %c0_i32_0 : i32, i32, i32
  }
}

</mosaic_0001>

<llo_original>
// kernel: sppf_forward.1
$region0: #{sppf_forward.1}
  #allocation0 [shape = 'u32[]', space=smem, size = 0x4, offset = 0x4, fixed_abs, tag = 'smem constant byte address 0x4 - core index']
  #allocation1 [shape = 'u32[144,128]{1,0:T(1,128)}', space=vmem, size = 0x12000, scoped, tag = 'internal scratch']
  %s0 = inlined_call_operand.vmem [shape: s32[2,256], index: 0, kind: input, shape index: {}]
  %s1 = inlined_call_operand.vmem [shape: f32[2,4,256], index: 1, kind: input, shape index: {}]
  %s2 = inlined_call_operand.vmem [shape: bf16[2,4], index: 2, kind: input, shape index: {}]
  %s3 = inlined_call_operand.vmem [shape: f32[2,1], index: 3, kind: input, shape index: {}]
  %s4 = inlined_call_operand.vmem [shape: bf16[4,8,2], index: 4, kind: input, shape index: {}]
  %s5 = inlined_call_operand.vmem [shape: f32[8,1], index: 5, kind: input, shape index: {}]
  %s6 = inlined_call_operand.vmem [shape: f32[2,8,256], index: 6, kind: output, shape index: {}]
  %s7 = sld [smem:[#allocation0]]
  $region57: #{sppf_forward.1} parent=0
    _
  %s9 = ssub.s32 1, %s7
  %s10 = scalar_select 0, %s9, %s7
  loop: start=0, step=1, limit=4
  $region2: #{sppf_forward.1} parent=0 // loop_pre_header
    _
  $region3: #{sppf_forward.1} parent=0 // loop_header
    %s12 = sphi 0, %s16
    %p13 = scmp.ge.s32.totalorder %s12, 4
    %s20 = sphi 0, %s20
    %s22 = sphi 0, %s20
    %s23 = sphi 0, %s22
    %s37 = sphi 0, %s23
    %s43 = sphi 0, %s45
    %s46 = sphi 0, %s43
    %s47 = sphi 0, %s46
    %s63 = sphi 0, %s47
    %s67 = sphi 0, %s67
    %s69 = sphi 0, %s67
    %s70 = sphi 0, %s69
    %s84 = sphi 0, %s70
    %s88 = sphi 0, %s88
    %s90 = sphi 0, %s88
    %s91 = sphi 0, %s90
    %s105 = sphi 0, %s91
    %s109 = sphi 0, %s109
    %s111 = sphi 0, %s109
    %s112 = sphi 0, %s111
    %s126 = sphi 0, %s112
    %s130 = sphi 0, %s130
    %s132 = sphi 0, %s130
    %s133 = sphi 0, %s132
    %s147 = sphi 0, %s133
    %s153 = sphi 0, %s155
    %s156 = sphi 0, %s153
    %s157 = sphi 0, %s156
    %s173 = sphi 0, %s157
  $region4: #{sppf_forward.1} parent=0 // loop_header_branch
    %15 = sbr.rel (%p13) target = $region8
  $region5: #{sppf_forward.1} parent=0 // loop_body
    %s17 = ssub.s32 %s12, 1
    %s18 = ssub.s32 %s12, 2
    %s19 = sadd.s32 %s12, 1
    %s21 = sadd.s32 %s20, 1
    %p24 = scmp.eq.s32.totalorder %s12, 1
    %p25 = scmp.ne.s32.totalorder %s20, %s22
    %p26 = scmp.eq.s32.totalorder %s12, 0
    %p27 = por %p25, %p26
    %p28 = scmp.ne.s32.totalorder %s20, %s22
    %p29 = scmp.eq.s32.totalorder %s17, 1
    %p30 = por %p28, %p29
    %p31 = scmp.ne.s32.totalorder %s22, %s23
    %p32 = scmp.eq.s32.totalorder %s17, 0
    %p33 = por %p31, %p32
    %p34 = scmp.ne.s32.totalorder %s22, %s23
    %p35 = scmp.eq.s32.totalorder %s18, 1
    %p36 = por %p34, %p35
    %p38 = scmp.ne.s32.totalorder %s23, %s37
    %p39 = scmp.eq.s32.totalorder %s18, 0
    %p40 = por %p38, %p39
    %s41 = ssub.s32 %s12, %s19
    %p42 = scmp.eq.s32.totalorder %s41, 0
    %s44 = sadd.s32 %s43, 1
    %s45 = scalar_select %p42, %s43, %s44
    %p48 = pneg %p42
    %p49 = scmp.eq.s32.totalorder %s12, 1
    %p50 = por %p48, %p49
    %p51 = scmp.ne.s32.totalorder %s43, %s46
    %p52 = scmp.eq.s32.totalorder %s12, 0
    %p53 = por %p51, %p52
    %p54 = scmp.ne.s32.totalorder %s43, %s46
    %p55 = scmp.eq.s32.totalorder %s17, 1
    %p56 = por %p54, %p55
    %p57 = scmp.ne.s32.totalorder %s46, %s47
    %p58 = scmp.eq.s32.totalorder %s17, 0
    %p59 = por %p57, %p58
    %p60 = scmp.ne.s32.totalorder %s46, %s47
    %p61 = scmp.eq.s32.totalorder %s18, 1
    %p62 = por %p60, %p61
    %p64 = scmp.ne.s32.totalorder %s47, %s63
    %p65 = scmp.eq.s32.totalorder %s18, 0
    %p66 = por %p64, %p65
    %s68 = sadd.s32 %s67, 1
    %p71 = scmp.eq.s32.totalorder %s12, 1
    %p72 = scmp.ne.s32.totalorder %s67, %s69
    %p73 = scmp.eq.s32.totalorder %s12, 0
    %p74 = por %p72, %p73
    %p75 = scmp.ne.s32.totalorder %s67, %s69
    %p76 = scmp.eq.s32.totalorder %s17, 1
    %p77 = por %p75, %p76
    %p78 = scmp.ne.s32.totalorder %s69, %s70
    %p79 = scmp.eq.s32.totalorder %s17, 0
    %p80 = por %p78, %p79
    %p81 = scmp.ne.s32.totalorder %s69, %s70
    %p82 = scmp.eq.s32.totalorder %s18, 1
    %p83 = por %p81, %p82
    %p85 = scmp.ne.s32.totalorder %s70, %s84
    %p86 = scmp.eq.s32.totalorder %s18, 0
    %p87 = por %p85, %p86
    %s89 = sadd.s32 %s88, 1
    %p92 = scmp.eq.s32.totalorder %s12, 1
    %p93 = scmp.ne.s32.totalorder %s88, %s90
    %p94 = scmp.eq.s32.totalorder %s12, 0
    %p95 = por %p93, %p94
    %p96 = scmp.ne.s32.totalorder %s88, %s90
    %p97 = scmp.eq.s32.totalorder %s17, 1
    %p98 = por %p96, %p97
    %p99 = scmp.ne.s32.totalorder %s90, %s91
    %p100 = scmp.eq.s32.totalorder %s17, 0
    %p101 = por %p99, %p100
    %p102 = scmp.ne.s32.totalorder %s90, %s91
    %p103 = scmp.eq.s32.totalorder %s18, 1
    %p104 = por %p102, %p103
    %p106 = scmp.ne.s32.totalorder %s91, %s105
    %p107 = scmp.eq.s32.totalorder %s18, 0
    %p108 = por %p106, %p107
    %s110 = sadd.s32 %s109, 1
    %p113 = scmp.eq.s32.totalorder %s12, 1
    %p114 = scmp.ne.s32.totalorder %s109, %s111
    %p115 = scmp.eq.s32.totalorder %s12, 0
    %p116 = por %p114, %p115
    %p117 = scmp.ne.s32.totalorder %s109, %s111
    %p118 = scmp.eq.s32.totalorder %s17, 1
    %p119 = por %p117, %p118
    %p120 = scmp.ne.s32.totalorder %s111, %s112
    %p121 = scmp.eq.s32.totalorder %s17, 0
    %p122 = por %p120, %p121
    %p123 = scmp.ne.s32.totalorder %s111, %s112
    %p124 = scmp.eq.s32.totalorder %s18, 1
    %p125 = por %p123, %p124
    %p127 = scmp.ne.s32.totalorder %s112, %s126
    %p128 = scmp.eq.s32.totalorder %s18, 0
    %p129 = por %p127, %p128
    %s131 = sadd.s32 %s130, 1
    %p134 = scmp.eq.s32.totalorder %s12, 1
    %p135 = scmp.ne.s32.totalorder %s130, %s132
    %p136 = scmp.eq.s32.totalorder %s12, 0
    %p137 = por %p135, %p136
    %p138 = scmp.ne.s32.totalorder %s130, %s132
    %p139 = scmp.eq.s32.totalorder %s17, 1
    %p140 = por %p138, %p139
    %p141 = scmp.ne.s32.totalorder %s132, %s133
    %p142 = scmp.eq.s32.totalorder %s17, 0
    %p143 = por %p141, %p142
    %p144 = scmp.ne.s32.totalorder %s132, %s133
    %p145 = scmp.eq.s32.totalorder %s18, 1
    %p146 = por %p144, %p145
    %p148 = scmp.ne.s32.totalorder %s133, %s147
    %p149 = scmp.eq.s32.totalorder %s18, 0
    %p150 = por %p148, %p149
    %s151 = ssub.s32 %s12, %s19
    %p152 = scmp.eq.s32.totalorder %s151, 0
    %s154 = sadd.s32 %s153, 1
    %s155 = scalar_select %p152, %s153, %s154
    %p158 = pneg %p152
    %p159 = scmp.eq.s32.totalorder %s12, 1
    %p160 = por %p158, %p159
    %p161 = scmp.ne.s32.totalorder %s153, %s156
    %p162 = scmp.eq.s32.totalorder %s12, 0
    %p163 = por %p161, %p162
    %p164 = scmp.ne.s32.totalorder %s153, %s156
    %p165 = scmp.eq.s32.totalorder %s17, 1
    %p166 = por %p164, %p165
    %p167 = scmp.ne.s32.totalorder %s156, %s157
    %p168 = scmp.eq.s32.totalorder %s17, 0
    %p169 = por %p167, %p168
    %p170 = scmp.ne.s32.totalorder %s156, %s157
    %p171 = scmp.eq.s32.totalorder %s18, 1
    %p172 = por %p170, %p171
    %p174 = scmp.ne.s32.totalorder %s157, %s173
    %p175 = scmp.eq.s32.totalorder %s18, 0
    %p176 = por %p174, %p175
    %p177 = scmp.le.s32.totalorder 1, %s12
    %p178 = scmp.lt.s32.totalorder %s12, 3
    %p179 = pnand %p177, %p178
    %p180 = pneg %p179
    // Predicated region
    $region9: #{sppf_forward.1} parent=5 // pred_check
      _
    $region10: #{sppf_forward.1} parent=5 // pred_check_branch
      %182 = sbr.rel (%p179) target = $region12
    $region11: #{sppf_forward.1} parent=5 // pred_region
      %s183 = ssub.s32 %s12, 1
      // Predicated region
      $region13: #{sppf_forward.1} parent=11 // pred_check
        %p184 = pneg %p33
      $region14: #{sppf_forward.1} parent=11 // pred_check_branch
        %186 = sbr.rel (%p184) target = $region16
      $region15: #{sppf_forward.1} parent=11 // pred_region
        _
      $region16: #{sppf_forward.1} parent=11 // pred_fallthru
        _
      // Predicated region
      $region17: #{sppf_forward.1} parent=11 // pred_check
        %p187 = pneg %p80
      $region18: #{sppf_forward.1} parent=11 // pred_check_branch
        %189 = sbr.rel (%p187) target = $region20
      $region19: #{sppf_forward.1} parent=11 // pred_region
        _
      $region20: #{sppf_forward.1} parent=11 // pred_fallthru
        _
      // Predicated region
      $region21: #{sppf_forward.1} parent=11 // pred_check
        %p190 = pneg %p101
      $region22: #{sppf_forward.1} parent=11 // pred_check_branch
        %192 = sbr.rel (%p190) target = $region24
      $region23: #{sppf_forward.1} parent=11 // pred_region
        _
      $region24: #{sppf_forward.1} parent=11 // pred_fallthru
        _
      // Predicated region
      $region25: #{sppf_forward.1} parent=11 // pred_check
        %p193 = pneg %p122
      $region26: #{sppf_forward.1} parent=11 // pred_check_branch
        %195 = sbr.rel (%p193) target = $region28
      $region27: #{sppf_forward.1} parent=11 // pred_region
        _
      $region28: #{sppf_forward.1} parent=11 // pred_fallthru
        _
      // Predicated region
      $region29: #{sppf_forward.1} parent=11 // pred_check
        %p196 = pneg %p143
      $region30: #{sppf_forward.1} parent=11 // pred_check_branch
        %198 = sbr.rel (%p196) target = $region32
      $region31: #{sppf_forward.1} parent=11 // pred_region
        _
      $region32: #{sppf_forward.1} parent=11 // pred_fallthru
        _
    $region12: #{sppf_forward.1} parent=5 // pred_fallthru
      _
    %p199 = scmp.lt.s32.totalorder %s12, 2
    // Predicated region
    $region33: #{sppf_forward.1} parent=5 // pred_check
      %p200 = pneg %p199
    $region34: #{sppf_forward.1} parent=5 // pred_check_branch
      %202 = sbr.rel (%p200) target = $region36
    $region35: #{sppf_forward.1} parent=5 // pred_region
      // Predicated region
      $region37: #{sppf_forward.1} parent=35 // pred_check
        %p203 = pneg %p53
      $region38: #{sppf_forward.1} parent=35 // pred_check_branch
        %205 = sbr.rel (%p203) target = $region40
      $region39: #{sppf_forward.1} parent=35 // pred_region
        %p206 = scmp.lt.s32.totalorder %s12, 1
        %s207 = scalar_select %p206, %s12, 1
        %s208 = smul.addr %s207, 2
        %s209 = smul.addr %s208, 4
        %s210 = scalar_lea.vmem %s1, %s209
      $region40: #{sppf_forward.1} parent=35 // pred_fallthru
        _
    $region36: #{sppf_forward.1} parent=5 // pred_fallthru
      _
    %p211 = scmp.le.s32.totalorder 1, %s12
    %p212 = scmp.lt.s32.totalorder %s12, 3
    %p213 = pnand %p211, %p212
    %p214 = pneg %p213
    // Predicated region
    $region41: #{sppf_forward.1} parent=5 // pred_check
      _
    $region42: #{sppf_forward.1} parent=5 // pred_check_branch
      %216 = sbr.rel (%p213) target = $region44
    $region43: #{sppf_forward.1} parent=5 // pred_region
      %s217 = ssub.s32 %s12, 1
      %p218 = pneg %p33
      %p219 = pneg %p30
      %p220 = scmp.lt.s32.totalorder %s17, 1
      %s221 = scalar_select %p220, %s17, 1
      %s222 = smul.addr %s221, 2
      %s223 = smul.addr %s222, 4
      %s224 = scalar_lea.vmem %s1, %s223
      %p225 = pneg %p59
      %p226 = pneg %p56
      %p227 = pneg %p80
      %p228 = pneg %p77
      %p229 = pneg %p101
      %p230 = pneg %p98
      %p231 = pneg %p122
      %p232 = pneg %p119
      %p233 = pneg %p143
      %p234 = pneg %p140
      %p235 = pneg %p169
      %p236 = pneg %p166
      %p237 = scmp.lt.s32.totalorder %s17, 1
      %s238 = scalar_select %p237, %s17, 1
      %s239 = smul.addr %s238, 2
      %s240 = smul.addr %s239, 8
      %s241 = scalar_lea.vmem %s6, %s240
      %p242 = scmp.lt.s32.totalorder %s17, 1
      %s243 = scalar_select %p242, %s17, 1
      %s244 = smul.addr %s243, 2
      %s245 = smul.addr %s244, 4
      %s246 = scalar_lea.vmem %s1, %s245
      %p247 = scmp.lt.s32.totalorder %s17, 1
      %s248 = scalar_select %p247, %s17, 1
      %s249 = smul.addr %s248, 2
      %s250 = smul.addr %s249, 8
      %s251 = scalar_lea.vmem %s6, %s250
      %v253 = vld [vmem:[%s0] sm:$0xf]
      %v255 = vunpack.c.l.s4 1983009808
      %v256 = vunpack.c.0.s8 %v255
      %v257 = vlaneseq
      %v258 = vshrl.u32 %v257, 7
      %v259 = vsub.s32 %v256, %v258
      %v260 = vrot.slane %v253, %v259
      %v261 = vcombine.high %v260, %v260
      %262 = vrot.lane.b32.xlu0 %v260, 127
      %v263 = vpop.permute.xlu0 %262
      %264 = vrot.lane.b32.xlu0 %v261, 127
      %v265 = vpop.permute.xlu0 %264
      %v266 = vlaneseq
      %v267 = vand.u32 %v266, 127
      %vm268 = vcmp.lt.s32.totalorder %v267, 127
      %v269 = vsel %vm268, %v263, %v265
      %v270 = vsel %vm268, %v265, %v263
      %v271 = vlaneseq
      %v272 = vshrl.u32 %v271, 7
      %v273 = vsub.s32 0, %v272
      %v274 = vrot.slane %v253, %v273
      %v275 = vlaneseq
      %v276 = vshrl.u32 %v275, 7
      %v277 = vsub.s32 2, %v276
      %v278 = vrot.slane %v253, %v277
      %v279 = vsub.s32 %v269, %v274
      %v280 = vsub.s32 %v270, %v278
      %v281 = vlaneseq
      %v282 = vshrl.u32 %v281, 7
      %v283 = vsub.s32 1, %v282
      %v284 = vrot.slane %v253, %v283
      %v285 = vlaneseq
      %v286 = vshrl.u32 %v285, 7
      %v287 = vsub.s32 3, %v286
      %v288 = vrot.slane %v253, %v287
      %vm289 = vcmp.eq.s32.totalorder %v269, %v284
      %vm290 = vcmp.eq.s32.totalorder %v270, %v288
      %vm291 = vcmp.lt.s32.totalorder %v279, 0
      %v292 = vsub.s32 0, %v279
      %v293 = vsel %vm291, %v292, %v279
      %vm294 = vcmp.lt.s32.totalorder %v280, 0
      %v295 = vsub.s32 0, %v280
      %v296 = vsel %vm294, %v295, %v280
      %vm297 = vcmp.le.s32.totalorder %v293, 2
      %vm298 = vcmp.le.s32.totalorder %v296, 2
      %v299 = vsel %vm297, 1, 0
      %v300 = vsel %vm298, 1, 0
      %v301 = vrot.slane %v299, 7
      %v302 = vrot.slane %v300, 7
      %vm303 = vcmp.ne.s32.totalorder %v301, 0
      %vm304 = vcmp.ne.s32.totalorder %v302, 0
      %vm305 = vmand %vm289, %vm303
      %vm306 = vmand %vm290, %vm304
      %vm307 = vcmp.ne.s32.totalorder %v279, 0
      %vm308 = vcmp.ne.s32.totalorder %v280, 0
      %v309 = vsel %vm307, 1, 0
      %v310 = vsel %vm308, 1, 0
      %v311 = vrot.slane %v309, 7
      %v312 = vrot.slane %v310, 7
      %vm313 = vcmp.ne.s32.totalorder %v311, 0
      %vm314 = vcmp.ne.s32.totalorder %v312, 0
      %vm315 = vmand %vm305, %vm313
      %vm316 = vmand %vm306, %vm314
      %v317 = vsel %vm315, 0.0, -inf
      %v318 = vsel %vm316, 0.0, -inf
      %v319 = vlaneseq
      %v320 = vshrl.u32 %v319, 7
      %v321 = vsub.s32 1, %v320
      %v322 = vrot.slane %v317, %v321
      %v323 = vlaneseq
      %v324 = vshrl.u32 %v323, 7
      %v325 = vsub.s32 1, %v324
      %v326 = vrot.slane %v318, %v325
      %327 = vrot.lane.b32.xlu0 %v260, 126
      %v328 = vpop.permute.xlu0 %327
      %329 = vrot.lane.b32.xlu0 %v261, 126
      %v330 = vpop.permute.xlu0 %329
      %vm331 = vcmp.lt.s32.totalorder %v267, 126
      %v332 = vsel %vm331, %v328, %v330
      %v333 = vsel %vm331, %v330, %v328
      %v334 = vsub.s32 %v332, %v274
      %v335 = vsub.s32 %v333, %v278
      %vm336 = vcmp.eq.s32.totalorder %v332, %v284
      %vm337 = vcmp.eq.s32.totalorder %v333, %v288
      %vm338 = vcmp.lt.s32.totalorder %v334, 0
      %v339 = vsub.s32 0, %v334
      %v340 = vsel %vm338, %v339, %v334
      %vm341 = vcmp.lt.s32.totalorder %v335, 0
      %v342 = vsub.s32 0, %v335
      %v343 = vsel %vm341, %v342, %v335
      %vm344 = vcmp.le.s32.totalorder %v340, 2
      %vm345 = vcmp.le.s32.totalorder %v343, 2
      %v346 = vsel %vm344, 1, 0
      %v347 = vsel %vm345, 1, 0
      %v348 = vrot.slane %v346, 7
      %v349 = vrot.slane %v347, 7
      %vm350 = vcmp.ne.s32.totalorder %v348, 0
      %vm351 = vcmp.ne.s32.totalorder %v349, 0
      %vm352 = vmand %vm336, %vm350
      %vm353 = vmand %vm337, %vm351
      %vm354 = vcmp.ne.s32.totalorder %v334, 0
      %vm355 = vcmp.ne.s32.totalorder %v335, 0
      %v356 = vsel %vm354, 1, 0
      %v357 = vsel %vm355, 1, 0
      %v358 = vrot.slane %v356, 7
      %v359 = vrot.slane %v357, 7
      %vm360 = vcmp.ne.s32.totalorder %v358, 0
      %vm361 = vcmp.ne.s32.totalorder %v359, 0
      %vm362 = vmand %vm352, %vm360
      %vm363 = vmand %vm353, %vm361
      %v364 = vsel %vm362, 0.0, -inf
      %v365 = vsel %vm363, 0.0, -inf
      %v366 = vlaneseq
      %v367 = vshrl.u32 %v366, 7
      %v368 = vsub.s32 1, %v367
      %v369 = vrot.slane %v364, %v368
      %v370 = vlaneseq
      %v371 = vshrl.u32 %v370, 7
      %v372 = vsub.s32 1, %v371
      %v373 = vrot.slane %v365, %v372
      %374 = vrot.lane.b32.xlu0 %v260, 1
      %v375 = vpop.permute.xlu0 %374
      %376 = vrot.lane.b32.xlu0 %v261, 1
      %v377 = vpop.permute.xlu0 %376
      %vm378 = vcmp.lt.s32.totalorder %v267, 1
      %v379 = vsel %vm378, %v375, %v377
      %v380 = vsel %vm378, %v377, %v375
      %v381 = vsub.s32 %v380, %v274
      %v382 = vsub.s32 %v379, %v278
      %vm383 = vcmp.eq.s32.totalorder %v380, %v284
      %vm384 = vcmp.eq.s32.totalorder %v379, %v288
      %vm385 = vcmp.lt.s32.totalorder %v381, 0
      %v386 = vsub.s32 0, %v381
      %v387 = vsel %vm385, %v386, %v381
      %vm388 = vcmp.lt.s32.totalorder %v382, 0
      %v389 = vsub.s32 0, %v382
      %v390 = vsel %vm388, %v389, %v382
      %vm391 = vcmp.le.s32.totalorder %v387, 2
      %vm392 = vcmp.le.s32.totalorder %v390, 2
      %v393 = vsel %vm391, 1, 0
      %v394 = vsel %vm392, 1, 0
      %v395 = vrot.slane %v393, 7
      %v396 = vrot.slane %v394, 7
      %vm397 = vcmp.ne.s32.totalorder %v395, 0
      %vm398 = vcmp.ne.s32.totalorder %v396, 0
      %vm399 = vmand %vm383, %vm397
      %vm400 = vmand %vm384, %vm398
      %vm401 = vcmp.ne.s32.totalorder %v381, 0
      %vm402 = vcmp.ne.s32.totalorder %v382, 0
      %v403 = vsel %vm401, 1, 0
      %v404 = vsel %vm402, 1, 0
      %v405 = vrot.slane %v403, 7
      %v406 = vrot.slane %v404, 7
      %vm407 = vcmp.ne.s32.totalorder %v405, 0
      %vm408 = vcmp.ne.s32.totalorder %v406, 0
      %vm409 = vmand %vm399, %vm407
      %vm410 = vmand %vm400, %vm408
      %v411 = vsel %vm409, 0.0, -inf
      %v412 = vsel %vm410, 0.0, -inf
      %v413 = vlaneseq
      %v414 = vshrl.u32 %v413, 7
      %v415 = vsub.s32 1, %v414
      %v416 = vrot.slane %v411, %v415
      %v417 = vlaneseq
      %v418 = vshrl.u32 %v417, 7
      %v419 = vsub.s32 1, %v418
      %v420 = vrot.slane %v412, %v419
      %421 = vrot.lane.b32.xlu0 %v260, 2
      %v422 = vpop.permute.xlu0 %421
      %423 = vrot.lane.b32.xlu0 %v261, 2
      %v424 = vpop.permute.xlu0 %423
      %vm425 = vcmp.lt.s32.totalorder %v267, 2
      %v426 = vsel %vm425, %v422, %v424
      %v427 = vsel %vm425, %v424, %v422
      %v428 = vsub.s32 %v427, %v274
      %v429 = vsub.s32 %v426, %v278
      %vm430 = vcmp.eq.s32.totalorder %v427, %v284
      %vm431 = vcmp.eq.s32.totalorder %v426, %v288
      %vm432 = vcmp.lt.s32.totalorder %v428, 0
      %v433 = vsub.s32 0, %v428
      %v434 = vsel %vm432, %v433, %v428
      %vm435 = vcmp.lt.s32.totalorder %v429, 0
      %v436 = vsub.s32 0, %v429
      %v437 = vsel %vm435, %v436, %v429
      %vm438 = vcmp.le.s32.totalorder %v434, 2
      %vm439 = vcmp.le.s32.totalorder %v437, 2
      %v440 = vsel %vm438, 1, 0
      %v441 = vsel %vm439, 1, 0
      %v442 = vrot.slane %v440, 7
      %v443 = vrot.slane %v441, 7
      %vm444 = vcmp.ne.s32.totalorder %v442, 0
      %vm445 = vcmp.ne.s32.totalorder %v443, 0
      %vm446 = vmand %vm430, %vm444
      %vm447 = vmand %vm431, %vm445
      %vm448 = vcmp.ne.s32.totalorder %v428, 0
      %vm449 = vcmp.ne.s32.totalorder %v429, 0
      %v450 = vsel %vm448, 1, 0
      %v451 = vsel %vm449, 1, 0
      %v452 = vrot.slane %v450, 7
      %v453 = vrot.slane %v451, 7
      %vm454 = vcmp.ne.s32.totalorder %v452, 0
      %vm455 = vcmp.ne.s32.totalorder %v453, 0
      %vm456 = vmand %vm446, %vm454
      %vm457 = vmand %vm447, %vm455
      %v458 = vsel %vm456, 0.0, -inf
      %v459 = vsel %vm457, 0.0, -inf
      %v460 = vlaneseq
      %v461 = vshrl.u32 %v460, 7
      %v462 = vsub.s32 1, %v461
      %v463 = vrot.slane %v458, %v462
      %v464 = vlaneseq
      %v465 = vshrl.u32 %v464, 7
      %v466 = vsub.s32 1, %v465
      %v467 = vrot.slane %v459, %v466
      %468 = vrot.lane.b32.xlu0 %v260, 112
      %v469 = vpop.permute.xlu0 %468
      %470 = vrot.lane.b32.xlu0 %v261, 112
      %v471 = vpop.permute.xlu0 %470
      %vm472 = vcmp.lt.s32.totalorder %v267, 112
      %v473 = vsel %vm472, %v469, %v471
      %v474 = vsel %vm472, %v471, %v469
      %v475 = vsub.s32 %v473, %v274
      %v476 = vsub.s32 %v474, %v278
      %vm477 = vcmp.lt.s32.totalorder %v475, 0
      %v478 = vsub.s32 0, %v475
      %v479 = vsel %vm477, %v478, %v475
      %vm480 = vcmp.lt.s32.totalorder %v476, 0
      %v481 = vsub.s32 0, %v476
      %v482 = vsel %vm480, %v481, %v476
      %vm483 = vcmp.eq.s32.totalorder %v479, 16
      %vm484 = vcmp.eq.s32.totalorder %v482, 16
      %vm485 = vcmp.eq.s32.totalorder %v479, 32
      %vm486 = vcmp.eq.s32.totalorder %v482, 32
      %vm487 = vmor %vm483, %vm485
      %vm488 = vmor %vm484, %vm486
      %v489 = vsel %vm487, 0.0, -inf
      %v490 = vsel %vm488, 0.0, -inf
      %v491 = vlaneseq
      %v492 = vshrl.u32 %v491, 7
      %v493 = vsub.s32 0, %v492
      %v494 = vrot.slane %v489, %v493
      %v495 = vlaneseq
      %v496 = vshrl.u32 %v495, 7
      %v497 = vsub.s32 0, %v496
      %v498 = vrot.slane %v490, %v497
      %499 = vrot.lane.b32.xlu0 %v260, 96
      %v500 = vpop.permute.xlu0 %499
      %501 = vrot.lane.b32.xlu0 %v261, 96
      %v502 = vpop.permute.xlu0 %501
      %vm503 = vcmp.lt.s32.totalorder %v267, 96
      %v504 = vsel %vm503, %v500, %v502
      %v505 = vsel %vm503, %v502, %v500
      %v506 = vsub.s32 %v504, %v274
      %v507 = vsub.s32 %v505, %v278
      %vm508 = vcmp.lt.s32.totalorder %v506, 0
      %v509 = vsub.s32 0, %v506
      %v510 = vsel %vm508, %v509, %v506
      %vm511 = vcmp.lt.s32.totalorder %v507, 0
      %v512 = vsub.s32 0, %v507
      %v513 = vsel %vm511, %v512, %v507
      %vm514 = vcmp.eq.s32.totalorder %v510, 16
      %vm515 = vcmp.eq.s32.totalorder %v513, 16
      %vm516 = vcmp.eq.s32.totalorder %v510, 32
      %vm517 = vcmp.eq.s32.totalorder %v513, 32
      %vm518 = vmor %vm514, %vm516
      %vm519 = vmor %vm515, %vm517
      %v520 = vsel %vm518, 0.0, -inf
      %v521 = vsel %vm519, 0.0, -inf
      %v522 = vlaneseq
      %v523 = vshrl.u32 %v522, 7
      %v524 = vsub.s32 0, %v523
      %v525 = vrot.slane %v520, %v524
      %v526 = vlaneseq
      %v527 = vshrl.u32 %v526, 7
      %v528 = vsub.s32 0, %v527
      %v529 = vrot.slane %v521, %v528
      %530 = vrot.lane.b32.xlu0 %v260, 16
      %v531 = vpop.permute.xlu0 %530
      %532 = vrot.lane.b32.xlu0 %v261, 16
      %v533 = vpop.permute.xlu0 %532
      %vm534 = vcmp.lt.s32.totalorder %v267, 16
      %v535 = vsel %vm534, %v531, %v533
      %v536 = vsel %vm534, %v533, %v531
      %v537 = vsub.s32 %v536, %v274
      %v538 = vsub.s32 %v535, %v278
      %vm539 = vcmp.lt.s32.totalorder %v537, 0
      %v540 = vsub.s32 0, %v537
      %v541 = vsel %vm539, %v540, %v537
      %vm542 = vcmp.lt.s32.totalorder %v538, 0
      %v543 = vsub.s32 0, %v538
      %v544 = vsel %vm542, %v543, %v538
      %vm545 = vcmp.eq.s32.totalorder %v541, 16
      %vm546 = vcmp.eq.s32.totalorder %v544, 16
      %vm547 = vcmp.eq.s32.totalorder %v541, 32
      %vm548 = vcmp.eq.s32.totalorder %v544, 32
      %vm549 = vmor %vm545, %vm547
      %vm550 = vmor %vm546, %vm548
      %v551 = vsel %vm549, 0.0, -inf
      %v552 = vsel %vm550, 0.0, -inf
      %v553 = vlaneseq
      %v554 = vshrl.u32 %v553, 7
      %v555 = vsub.s32 0, %v554
      %v556 = vrot.slane %v551, %v555
      %v557 = vlaneseq
      %v558 = vshrl.u32 %v557, 7
      %v559 = vsub.s32 0, %v558
      %v560 = vrot.slane %v552, %v559
      %561 = vrot.lane.b32.xlu0 %v260, 32
      %v562 = vpop.permute.xlu0 %561
      %563 = vrot.lane.b32.xlu0 %v261, 32
      %v564 = vpop.permute.xlu0 %563
      %vm565 = vcmp.lt.s32.totalorder %v267, 32
      %v566 = vsel %vm565, %v562, %v564
      %v567 = vsel %vm565, %v564, %v562
      %v568 = vsub.s32 %v567, %v274
      %v569 = vsub.s32 %v566, %v278
      %vm570 = vcmp.lt.s32.totalorder %v568, 0
      %v571 = vsub.s32 0, %v568
      %v572 = vsel %vm570, %v571, %v568
      %vm573 = vcmp.lt.s32.totalorder %v569, 0
      %v574 = vsub.s32 0, %v569
      %v575 = vsel %vm573, %v574, %v569
      %vm576 = vcmp.eq.s32.totalorder %v572, 16
      %vm577 = vcmp.eq.s32.totalorder %v575, 16
      %vm578 = vcmp.eq.s32.totalorder %v572, 32
      %vm579 = vcmp.eq.s32.totalorder %v575, 32
      %vm580 = vmor %vm576, %vm578
      %vm581 = vmor %vm577, %vm579
      %v582 = vsel %vm580, 0.0, -inf
      %v583 = vsel %vm581, 0.0, -inf
      %v584 = vlaneseq
      %v585 = vshrl.u32 %v584, 7
      %v586 = vsub.s32 0, %v585
      %v587 = vrot.slane %v582, %v586
      %v588 = vlaneseq
      %v589 = vshrl.u32 %v588, 7
      %v590 = vsub.s32 0, %v589
      %v591 = vrot.slane %v583, %v590
      %v592 = vld [vmem:[%s246] sm:$0xff]
      %v594 = vcombine.high %v592, %v592
      %v596 = vpack.c.bf16 %v592, %v592
      %v597 = vpack.c.bf16 %v594, %v594
      %v598 = vld [vmem:[%s2] sm:$0x1]
      %v599 = vld [vmem:[%s3] sm:$0x3]
      %601 = vset.pattern.permute.xlu0 0
      %602 = vperm.xlu0 %601, %v599
      %v603 = vpop.permute.xlu0 %602
      %vm605 = vcmask 31744
      %v607 = vsel %vm605, %v598, 0
      %vm609 = vcmask 1041408
      %v611 = vsel %vm609, %v596, 0
      %v614 = vsel %vm609, %v597, 0
      %616 = vmatprep.subr.bf16.mxu0 %v614
      %617 = vmatpush1.bf16.msra.mxu0 %v611
      %618 = vmatprep.subr.bf16.mxu0 0
      %619 = vmatpush1.bf16.msra.mxu0 0
      %620 = vmatprep.subr.bf16.mxu0 0
      %621 = vmatpush1.bf16.msra.mxu0 0
      %622 = vmatprep.subr.bf16.mxu0 0
      %623 = vmatpush1.bf16.msra.mxu0 0
      %624 = vmatprep.subr.bf16.mxu0 0
      %625 = vmatpush1.bf16.msra.mxu0 0
      %626 = vmatprep.subr.bf16.mxu0 0
      %627 = vmatpush1.bf16.msra.mxu0 0
      %628 = vmatprep.subr.bf16.mxu0 0
      %629 = vmatpush1.bf16.msra.mxu0 0
      %630 = vmatprep.subr.bf16.mxu0 0
      %631 = vmatpush1.bf16.msra.mxu0 0
      %632 = vmatprep.subr.bf16.mxu0 0
      %633 = vmatpush1.bf16.msra.mxu0 0
      %634 = vmatprep.subr.bf16.mxu0 0
      %635 = vmatpush1.bf16.msra.mxu0 0
      %636 = vmatprep.subr.bf16.mxu0 0
      %637 = vmatpush1.bf16.msra.mxu0 0
      %638 = vmatprep.subr.bf16.mxu0 0
      %639 = vmatpush1.bf16.msra.mxu0 0
      %640 = vmatprep.subr.bf16.mxu0 0
      %641 = vmatpush1.bf16.msra.mxu0 0
      %642 = vmatprep.subr.bf16.mxu0 0
      %643 = vmatpush1.bf16.msra.mxu0 0
      %644 = vmatprep.subr.bf16.mxu0 0
      %645 = vmatpush1.bf16.msra.mxu0 0
      %646 = vmatprep.subr.bf16.mxu0 0
      %647 = vmatpush1.bf16.msra.mxu0 0
      %648 = vmatprep.mubr.bf16.mxu0 0
      %649 = vmatmul.mubr.bf16.gmra.mrb[0].mxu0 %v607
      %v650 = vpop.f32.mrb[0].mxu0
      %v651 = vadd.f32 %v603, %v650
      %v652 = vpop.f32.mrb[0].mxu0
      %v653 = vadd.f32 %v603, %v652
      %v654 = vpop.f32.mrb[0].mxu0
      %v655 = vpop.f32.mrb[0].mxu0
      %656 = vdwg.mxu0
      %v657 = vsub.f32 0.0, %v651
      %v658 = vsub.f32 0.0, %v653
      %v659 = vmul.f32 %v657, 1.442695
      %v660 = vpow.pop %v659
      %v661 = vmul.f32 %v658, 1.442695
      %v662 = vpow.pop %v661
      %v663 = vadd.f32 %v660, 1.0
      %v664 = vadd.f32 %v662, 1.0
      %v665 = vrcp.pop %v663
      %v666 = vrcp.pop %v664
      %v667 = vmul.f32 %v651, %v665
      %v668 = vmul.f32 %v653, %v666
      %v669 = vld [vmem:[%s4] sm:$0xf]
      %v670 = vpack.c.bf16 %v667, %v667
      %v671 = vpack.c.bf16 %v668, %v668
      %672 = vrot.lane.b32.xlu0 %v667, 127
      %v673 = vpop.permute.xlu0 %672
      %674 = vrot.lane.b32.xlu0 %v668, 127
      %v675 = vpop.permute.xlu0 %674
      %v676 = vsel %vm268, %v673, %v675
      %v677 = vsel %vm268, %v675, %v673
      %v678 = vadd.f32 %v676, %v322
      %v679 = vadd.f32 %v677, %v326
      %v680 = vmax.f32 %v667, %v678
      %v681 = vmax.f32 %v668, %v679
      %682 = vrot.lane.b32.xlu0 %v667, 126
      %v683 = vpop.permute.xlu0 %682
      %684 = vrot.lane.b32.xlu0 %v668, 126
      %v685 = vpop.permute.xlu0 %684
      %v686 = vsel %vm331, %v683, %v685
      %v687 = vsel %vm331, %v685, %v683
      %v688 = vadd.f32 %v686, %v369
      %v689 = vadd.f32 %v687, %v373
      %v690 = vmax.f32 %v680, %v688
      %v691 = vmax.f32 %v681, %v689
      %692 = vrot.lane.b32.xlu0 %v667, 1
      %v693 = vpop.permute.xlu0 %692
      %694 = vrot.lane.b32.xlu0 %v668, 1
      %v695 = vpop.permute.xlu0 %694
      %v696 = vsel %vm378, %v693, %v695
      %v697 = vsel %vm378, %v695, %v693
      %v698 = vadd.f32 %v697, %v416
      %v699 = vadd.f32 %v696, %v420
      %v700 = vmax.f32 %v690, %v698
      %v701 = vmax.f32 %v691, %v699
      %702 = vrot.lane.b32.xlu0 %v667, 2
      %v703 = vpop.permute.xlu0 %702
      %704 = vrot.lane.b32.xlu0 %v668, 2
      %v705 = vpop.permute.xlu0 %704
      %v706 = vsel %vm425, %v703, %v705
      %v707 = vsel %vm425, %v705, %v703
      %v708 = vadd.f32 %v707, %v463
      %v709 = vadd.f32 %v706, %v467
      %v710 = vmax.f32 %v700, %v708
      %v711 = vmax.f32 %v701, %v709
      %712 = vrot.lane.b32.xlu0 %v710, 112
      %v713 = vpop.permute.xlu0 %712
      %714 = vrot.lane.b32.xlu0 %v711, 112
      %v715 = vpop.permute.xlu0 %714
      %v716 = vsel %vm472, %v713, %v715
      %v717 = vsel %vm472, %v715, %v713
      %v718 = vadd.f32 %v716, %v494
      %v719 = vadd.f32 %v717, %v498
      %v720 = vmax.f32 %v710, %v718
      %v721 = vmax.f32 %v711, %v719
      %722 = vrot.lane.b32.xlu0 %v710, 96
      %v723 = vpop.permute.xlu0 %722
      %724 = vrot.lane.b32.xlu0 %v711, 96
      %v725 = vpop.permute.xlu0 %724
      %v726 = vsel %vm503, %v723, %v725
      %v727 = vsel %vm503, %v725, %v723
      %v728 = vadd.f32 %v726, %v525
      %v729 = vadd.f32 %v727, %v529
      %v730 = vmax.f32 %v720, %v728
      %v731 = vmax.f32 %v721, %v729
      %732 = vrot.lane.b32.xlu0 %v710, 16
      %v733 = vpop.permute.xlu0 %732
      %734 = vrot.lane.b32.xlu0 %v711, 16
      %v735 = vpop.permute.xlu0 %734
      %v736 = vsel %vm534, %v733, %v735
      %v737 = vsel %vm534, %v735, %v733
      %v738 = vadd.f32 %v737, %v556
      %v739 = vadd.f32 %v736, %v560
      %v740 = vmax.f32 %v730, %v738
      %v741 = vmax.f32 %v731, %v739
      %742 = vrot.lane.b32.xlu0 %v710, 32
      %v743 = vpop.permute.xlu0 %742
      %744 = vrot.lane.b32.xlu0 %v711, 32
      %v745 = vpop.permute.xlu0 %744
      %v746 = vsel %vm565, %v743, %v745
      %v747 = vsel %vm565, %v745, %v743
      %v748 = vadd.f32 %v747, %v587
      %v749 = vadd.f32 %v746, %v591
      %v750 = vmax.f32 %v740, %v748
      %v751 = vmax.f32 %v741, %v749
      %s752 = scalar_lea.vmem %s4, 4
      %v753 = vld [vmem:[%s752] sm:$0xf]
      %v754 = vpack.c.bf16 %v750, %v750
      %v755 = vpack.c.bf16 %v751, %v751
      %vm756 = vcmask 15360
      %v758 = vsel %vm756, %v753, 0
      %vm760 = vcmask 1040384
      %v762 = vsel %vm760, %v754, 0
      %v765 = vsel %vm760, %v755, 0
      %767 = vmatprep.subr.bf16.mxu0 %v765
      %768 = vmatpush1.bf16.msra.mxu0 %v762
      %769 = vmatprep.subr.bf16.mxu0 0
      %770 = vmatpush1.bf16.msra.mxu0 0
      %771 = vmatprep.subr.bf16.mxu0 0
      %772 = vmatpush1.bf16.msra.mxu0 0
      %773 = vmatprep.subr.bf16.mxu0 0
      %774 = vmatpush1.bf16.msra.mxu0 0
      %775 = vmatprep.subr.bf16.mxu0 0
      %776 = vmatpush1.bf16.msra.mxu0 0
      %777 = vmatprep.subr.bf16.mxu0 0
      %778 = vmatpush1.bf16.msra.mxu0 0
      %779 = vmatprep.subr.bf16.mxu0 0
      %780 = vmatpush1.bf16.msra.mxu0 0
      %781 = vmatprep.subr.bf16.mxu0 0
      %782 = vmatpush1.bf16.msra.mxu0 0
      %783 = vmatprep.subr.bf16.mxu0 0
      %784 = vmatpush1.bf16.msra.mxu0 0
      %785 = vmatprep.subr.bf16.mxu0 0
      %786 = vmatpush1.bf16.msra.mxu0 0
      %787 = vmatprep.subr.bf16.mxu0 0
      %788 = vmatpush1.bf16.msra.mxu0 0
      %789 = vmatprep.subr.bf16.mxu0 0
      %790 = vmatpush1.bf16.msra.mxu0 0
      %791 = vmatprep.subr.bf16.mxu0 0
      %792 = vmatpush1.bf16.msra.mxu0 0
      %793 = vmatprep.subr.bf16.mxu0 0
      %794 = vmatpush1.bf16.msra.mxu0 0
      %795 = vmatprep.subr.bf16.mxu0 0
      %796 = vmatpush1.bf16.msra.mxu0 0
      %797 = vmatprep.subr.bf16.mxu0 0
      %798 = vmatpush1.bf16.msra.mxu0 0
      %799 = vmatprep.mubr.bf16.mxu0 0
      %800 = vmatmul.mubr.bf16.gmra.mrb[0].mxu0 %v758
      %v801 = vpop.f32.mrb[0].mxu0
      %v802 = vadd.f32 0.0, %v801
      %v803 = vpop.f32.mrb[0].mxu0
      %v804 = vadd.f32 0.0, %v803
      %v805 = vpop.f32.mrb[0].mxu0
      %v806 = vpop.f32.mrb[0].mxu0
      %807 = vdwg.mxu0
      %v809 = vsel %vm756, %v669, 0
      %v812 = vsel %vm760, %v670, 0
      %v815 = vsel %vm760, %v671, 0
      %817 = vmatprep.subr.bf16.mxu0 %v815
      %818 = vmatpush1.bf16.msra.mxu0 %v812
      %819 = vmatprep.subr.bf16.mxu0 0
      %820 = vmatpush1.bf16.msra.mxu0 0
      %821 = vmatprep.subr.bf16.mxu0 0
      %822 = vmatpush1.bf16.msra.mxu0 0
      %823 = vmatprep.subr.bf16.mxu0 0
      %824 = vmatpush1.bf16.msra.mxu0 0
      %825 = vmatprep.subr.bf16.mxu0 0
      %826 = vmatpush1.bf16.msra.mxu0 0
      %827 = vmatprep.subr.bf16.mxu0 0
      %828 = vmatpush1.bf16.msra.mxu0 0
      %829 = vmatprep.subr.bf16.mxu0 0
      %830 = vmatpush1.bf16.msra.mxu0 0
      %831 = vmatprep.subr.bf16.mxu0 0
      %832 = vmatpush1.bf16.msra.mxu0 0
      %833 = vmatprep.subr.bf16.mxu0 0
      %834 = vmatpush1.bf16.msra.mxu0 0
      %835 = vmatprep.subr.bf16.mxu0 0
      %836 = vmatpush1.bf16.msra.mxu0 0
      %837 = vmatprep.subr.bf16.mxu0 0
      %838 = vmatpush1.bf16.msra.mxu0 0
      %839 = vmatprep.subr.bf16.mxu0 0
      %840 = vmatpush1.bf16.msra.mxu0 0
      %841 = vmatprep.subr.bf16.mxu0 0
      %842 = vmatpush1.bf16.msra.mxu0 0
      %843 = vmatprep.subr.bf16.mxu0 0
      %844 = vmatpush1.bf16.msra.mxu0 0
      %845 = vmatprep.subr.bf16.mxu0 0
      %846 = vmatpush1.bf16.msra.mxu0 0
      %847 = vmatprep.subr.bf16.mxu0 0
      %848 = vmatpush1.bf16.msra.mxu0 0
      %849 = vmatprep.mubr.bf16.mxu0 0
      %850 = vmatmul.mubr.bf16.gmra.mrb[0].mxu0 %v809
      %v851 = vpop.f32.mrb[0].mxu0
      %v852 = vadd.f32 %v802, %v851
      %v853 = vpop.f32.mrb[0].mxu0
      %v854 = vadd.f32 %v804, %v853
      %v855 = vpop.f32.mrb[0].mxu0
      %v856 = vpop.f32.mrb[0].mxu0
      %857 = vdwg.mxu0
      %858 = vrot.lane.b32.xlu0 %v750, 127
      %v859 = vpop.permute.xlu0 %858
      %860 = vrot.lane.b32.xlu0 %v751, 127
      %v861 = vpop.permute.xlu0 %860
      %v862 = vsel %vm268, %v859, %v861
      %v863 = vsel %vm268, %v861, %v859
      %v864 = vadd.f32 %v862, %v322
      %v865 = vadd.f32 %v863, %v326
      %v866 = vmax.f32 %v750, %v864
      %v867 = vmax.f32 %v751, %v865
      %868 = vrot.lane.b32.xlu0 %v750, 126
      %v869 = vpop.permute.xlu0 %868
      %870 = vrot.lane.b32.xlu0 %v751, 126
      %v871 = vpop.permute.xlu0 %870
      %v872 = vsel %vm331, %v869, %v871
      %v873 = vsel %vm331, %v871, %v869
      %v874 = vadd.f32 %v872, %v369
      %v875 = vadd.f32 %v873, %v373
      %v876 = vmax.f32 %v866, %v874
      %v877 = vmax.f32 %v867, %v875
      %878 = vrot.lane.b32.xlu0 %v750, 1
      %v879 = vpop.permute.xlu0 %878
      %880 = vrot.lane.b32.xlu0 %v751, 1
      %v881 = vpop.permute.xlu0 %880
      %v882 = vsel %vm378, %v879, %v881
      %v883 = vsel %vm378, %v881, %v879
      %v884 = vadd.f32 %v883, %v416
      %v885 = vadd.f32 %v882, %v420
      %v886 = vmax.f32 %v876, %v884
      %v887 = vmax.f32 %v877, %v885
      %888 = vrot.lane.b32.xlu0 %v750, 2
      %v889 = vpop.permute.xlu0 %888
      %890 = vrot.lane.b32.xlu0 %v751, 2
      %v891 = vpop.permute.xlu0 %890
      %v892 = vsel %vm425, %v889, %v891
      %v893 = vsel %vm425, %v891, %v889
      %v894 = vadd.f32 %v893, %v463
      %v895 = vadd.f32 %v892, %v467
      %v896 = vmax.f32 %v886, %v894
      %v897 = vmax.f32 %v887, %v895
      %898 = vrot.lane.b32.xlu0 %v896, 112
      %v899 = vpop.permute.xlu0 %898
      %900 = vrot.lane.b32.xlu0 %v897, 112
      %v901 = vpop.permute.xlu0 %900
      %v902 = vsel %vm472, %v899, %v901
      %v903 = vsel %vm472, %v901, %v899
      %v904 = vadd.f32 %v902, %v494
      %v905 = vadd.f32 %v903, %v498
      %v906 = vmax.f32 %v896, %v904
      %v907 = vmax.f32 %v897, %v905
      %908 = vrot.lane.b32.xlu0 %v896, 96
      %v909 = vpop.permute.xlu0 %908
      %910 = vrot.lane.b32.xlu0 %v897, 96
      %v911 = vpop.permute.xlu0 %910
      %v912 = vsel %vm503, %v909, %v911
      %v913 = vsel %vm503, %v911, %v909
      %v914 = vadd.f32 %v912, %v525
      %v915 = vadd.f32 %v913, %v529
      %v916 = vmax.f32 %v906, %v914
      %v917 = vmax.f32 %v907, %v915
      %918 = vrot.lane.b32.xlu0 %v896, 16
      %v919 = vpop.permute.xlu0 %918
      %920 = vrot.lane.b32.xlu0 %v897, 16
      %v921 = vpop.permute.xlu0 %920
      %v922 = vsel %vm534, %v919, %v921
      %v923 = vsel %vm534, %v921, %v919
      %v924 = vadd.f32 %v923, %v556
      %v925 = vadd.f32 %v922, %v560
      %v926 = vmax.f32 %v916, %v924
      %v927 = vmax.f32 %v917, %v925
      %928 = vrot.lane.b32.xlu0 %v896, 32
      %v929 = vpop.permute.xlu0 %928
      %930 = vrot.lane.b32.xlu0 %v897, 32
      %v931 = vpop.permute.xlu0 %930
      %v932 = vsel %vm565, %v929, %v931
      %v933 = vsel %vm565, %v931, %v929
      %v934 = vadd.f32 %v933, %v587
      %v935 = vadd.f32 %v932, %v591
      %v936 = vmax.f32 %v926, %v934
      %v937 = vmax.f32 %v927, %v935
      %s938 = scalar_lea.vmem %s4, 8
      %v939 = vld [vmem:[%s938] sm:$0xf]
      %v940 = vpack.c.bf16 %v936, %v936
      %v941 = vpack.c.bf16 %v937, %v937
      %v943 = vsel %vm756, %v939, 0
      %v946 = vsel %vm760, %v940, 0
      %v949 = vsel %vm760, %v941, 0
      %951 = vmatprep.subr.bf16.mxu0 %v949
      %952 = vmatpush1.bf16.msra.mxu0 %v946
      %953 = vmatprep.subr.bf16.mxu0 0
      %954 = vmatpush1.bf16.msra.mxu0 0
      %955 = vmatprep.subr.bf16.mxu0 0
      %956 = vmatpush1.bf16.msra.mxu0 0
      %957 = vmatprep.subr.bf16.mxu0 0
      %958 = vmatpush1.bf16.msra.mxu0 0
      %959 = vmatprep.subr.bf16.mxu0 0
      %960 = vmatpush1.bf16.msra.mxu0 0
      %961 = vmatprep.subr.bf16.mxu0 0
      %962 = vmatpush1.bf16.msra.mxu0 0
      %963 = vmatprep.subr.bf16.mxu0 0
      %964 = vmatpush1.bf16.msra.mxu0 0
      %965 = vmatprep.subr.bf16.mxu0 0
      %966 = vmatpush1.bf16.msra.mxu0 0
      %967 = vmatprep.subr.bf16.mxu0 0
      %968 = vmatpush1.bf16.msra.mxu0 0
      %969 = vmatprep.subr.bf16.mxu0 0
      %970 = vmatpush1.bf16.msra.mxu0 0
      %971 = vmatprep.subr.bf16.mxu0 0
      %972 = vmatpush1.bf16.msra.mxu0 0
      %973 = vmatprep.subr.bf16.mxu0 0
      %974 = vmatpush1.bf16.msra.mxu0 0
      %975 = vmatprep.subr.bf16.mxu0 0
      %976 = vmatpush1.bf16.msra.mxu0 0
      %977 = vmatprep.subr.bf16.mxu0 0
      %978 = vmatpush1.bf16.msra.mxu0 0
      %979 = vmatprep.subr.bf16.mxu0 0
      %980 = vmatpush1.bf16.msra.mxu0 0
      %981 = vmatprep.subr.bf16.mxu0 0
      %982 = vmatpush1.bf16.msra.mxu0 0
      %983 = vmatprep.mubr.bf16.mxu0 0
      %984 = vmatmul.mubr.bf16.gmra.mrb[0].mxu0 %v943
      %v985 = vpop.f32.mrb[0].mxu0
      %v986 = vadd.f32 0.0, %v985
      %v987 = vpop.f32.mrb[0].mxu0
      %v988 = vadd.f32 0.0, %v987
      %v989 = vpop.f32.mrb[0].mxu0
      %v990 = vpop.f32.mrb[0].mxu0
      %991 = vdwg.mxu0
      %v992 = vadd.f32 %v852, %v986
      %v993 = vadd.f32 %v854, %v988
      %994 = vrot.lane.b32.xlu0 %v936, 127
      %v995 = vpop.permute.xlu0 %994
      %996 = vrot.lane.b32.xlu0 %v937, 127
      %v997 = vpop.permute.xlu0 %996
      %v998 = vsel %vm268, %v995, %v997
      %v999 = vsel %vm268, %v997, %v995
      %v1000 = vadd.f32 %v998, %v322
      %v1001 = vadd.f32 %v999, %v326
      %v1002 = vmax.f32 %v936, %v1000
      %v1003 = vmax.f32 %v937, %v1001
      %1004 = vrot.lane.b32.xlu0 %v936, 126
      %v1005 = vpop.permute.xlu0 %1004
      %1006 = vrot.lane.b32.xlu0 %v937, 126
      %v1007 = vpop.permute.xlu0 %1006
      %v1008 = vsel %vm331, %v1005, %v1007
      %v1009 = vsel %vm331, %v1007, %v1005
      %v1010 = vadd.f32 %v1008, %v369
      %v1011 = vadd.f32 %v1009, %v373
      %v1012 = vmax.f32 %v1002, %v1010
      %v1013 = vmax.f32 %v1003, %v1011
      %1014 = vrot.lane.b32.xlu0 %v936, 1
      %v1015 = vpop.permute.xlu0 %1014
      %1016 = vrot.lane.b32.xlu0 %v937, 1
      %v1017 = vpop.permute.xlu0 %1016
      %v1018 = vsel %vm378, %v1015, %v1017
      %v1019 = vsel %vm378, %v1017, %v1015
      %v1020 = vadd.f32 %v1019, %v416
      %v1021 = vadd.f32 %v1018, %v420
      %v1022 = vmax.f32 %v1012, %v1020
      %v1023 = vmax.f32 %v1013, %v1021
      %1024 = vrot.lane.b32.xlu0 %v936, 2
      %v1025 = vpop.permute.xlu0 %1024
      %1026 = vrot.lane.b32.xlu0 %v937, 2
      %v1027 = vpop.permute.xlu0 %1026
      %v1028 = vsel %vm425, %v1025, %v1027
      %v1029 = vsel %vm425, %v1027, %v1025
      %v1030 = vadd.f32 %v1029, %v463
      %v1031 = vadd.f32 %v1028, %v467
      %v1032 = vmax.f32 %v1022, %v1030
      %v1033 = vmax.f32 %v1023, %v1031
      %1034 = vrot.lane.b32.xlu0 %v1032, 112
      %v1035 = vpop.permute.xlu0 %1034
      %1036 = vrot.lane.b32.xlu0 %v1033, 112
      %v1037 = vpop.permute.xlu0 %1036
      %v1038 = vsel %vm472, %v1035, %v1037
      %v1039 = vsel %vm472, %v1037, %v1035
      %v1040 = vadd.f32 %v1038, %v494
      %v1041 = vadd.f32 %v1039, %v498
      %v1042 = vmax.f32 %v1032, %v1040
      %v1043 = vmax.f32 %v1033, %v1041
      %1044 = vrot.lane.b32.xlu0 %v1032, 96
      %v1045 = vpop.permute.xlu0 %1044
      %1046 = vrot.lane.b32.xlu0 %v1033, 96
      %v1047 = vpop.permute.xlu0 %1046
      %v1048 = vsel %vm503, %v1045, %v1047
      %v1049 = vsel %vm503, %v1047, %v1045
      %v1050 = vadd.f32 %v1048, %v525
      %v1051 = vadd.f32 %v1049, %v529
      %v1052 = vmax.f32 %v1042, %v1050
      %v1053 = vmax.f32 %v1043, %v1051
      %1054 = vrot.lane.b32.xlu0 %v1032, 16
      %v1055 = vpop.permute.xlu0 %1054
      %1056 = vrot.lane.b32.xlu0 %v1033, 16
      %v1057 = vpop.permute.xlu0 %1056
      %v1058 = vsel %vm534, %v1055, %v1057
      %v1059 = vsel %vm534, %v1057, %v1055
      %v1060 = vadd.f32 %v1059, %v556
      %v1061 = vadd.f32 %v1058, %v560
      %v1062 = vmax.f32 %v1052, %v1060
      %v1063 = vmax.f32 %v1053, %v1061
      %1064 = vrot.lane.b32.xlu0 %v1032, 32
      %v1065 = vpop.permute.xlu0 %1064
      %1066 = vrot.lane.b32.xlu0 %v1033, 32
      %v1067 = vpop.permute.xlu0 %1066
      %v1068 = vsel %vm565, %v1065, %v1067
      %v1069 = vsel %vm565, %v1067, %v1065
      %v1070 = vadd.f32 %v1069, %v587
      %v1071 = vadd.f32 %v1068, %v591
      %v1072 = vmax.f32 %v1062, %v1070
      %v1073 = vmax.f32 %v1063, %v1071
      %s1074 = scalar_lea.vmem %s4, 12
      %v1075 = vld [vmem:[%s1074] sm:$0xf]
      %v1076 = vpack.c.bf16 %v1072, %v1072
      %v1077 = vpack.c.bf16 %v1073, %v1073
      %v1079 = vsel %vm756, %v1075, 0
      %v1082 = vsel %vm760, %v1076, 0
      %v1085 = vsel %vm760, %v1077, 0
      %1087 = vmatprep.subr.bf16.mxu0 %v1085
      %1088 = vmatpush1.bf16.msra.mxu0 %v1082
      %1089 = vmatprep.subr.bf16.mxu0 0
      %1090 = vmatpush1.bf16.msra.mxu0 0
      %1091 = vmatprep.subr.bf16.mxu0 0
      %1092 = vmatpush1.bf16.msra.mxu0 0
      %1093 = vmatprep.subr.bf16.mxu0 0
      %1094 = vmatpush1.bf16.msra.mxu0 0
      %1095 = vmatprep.subr.bf16.mxu0 0
      %1096 = vmatpush1.bf16.msra.mxu0 0
      %1097 = vmatprep.subr.bf16.mxu0 0
      %1098 = vmatpush1.bf16.msra.mxu0 0
      %1099 = vmatprep.subr.bf16.mxu0 0
      %1100 = vmatpush1.bf16.msra.mxu0 0
      %1101 = vmatprep.subr.bf16.mxu0 0
      %1102 = vmatpush1.bf16.msra.mxu0 0
      %1103 = vmatprep.subr.bf16.mxu0 0
      %1104 = vmatpush1.bf16.msra.mxu0 0
      %1105 = vmatprep.subr.bf16.mxu0 0
      %1106 = vmatpush1.bf16.msra.mxu0 0
      %1107 = vmatprep.subr.bf16.mxu0 0
      %1108 = vmatpush1.bf16.msra.mxu0 0
      %1109 = vmatprep.subr.bf16.mxu0 0
      %1110 = vmatpush1.bf16.msra.mxu0 0
      %1111 = vmatprep.subr.bf16.mxu0 0
      %1112 = vmatpush1.bf16.msra.mxu0 0
      %1113 = vmatprep.subr.bf16.mxu0 0
      %1114 = vmatpush1.bf16.msra.mxu0 0
      %1115 = vmatprep.subr.bf16.mxu0 0
      %1116 = vmatpush1.bf16.msra.mxu0 0
      %1117 = vmatprep.subr.bf16.mxu0 0
      %1118 = vmatpush1.bf16.msra.mxu0 0
      %1119 = vmatprep.mubr.bf16.mxu0 0
      %1120 = vmatmul.mubr.bf16.gmra.mrb[0].mxu0 %v1079
      %v1121 = vpop.f32.mrb[0].mxu0
      %v1122 = vadd.f32 0.0, %v1121
      %v1123 = vpop.f32.mrb[0].mxu0
      %v1124 = vadd.f32 0.0, %v1123
      %v1125 = vpop.f32.mrb[0].mxu0
      %v1126 = vpop.f32.mrb[0].mxu0
      %1127 = vdwg.mxu0
      %v1128 = vadd.f32 %v992, %v1122
      %v1129 = vadd.f32 %v993, %v1124
      %v1130 = vld [vmem:[%s5] sm:$0xff]
      %1132 = vset.pattern.permute.xlu0 0
      %1133 = vperm.xlu0 %1132, %v1130
      %v1134 = vpop.permute.xlu0 %1133
      %v1136 = vadd.f32 %v1128, %v1134
      %v1137 = vadd.f32 %v1129, %v1134
      %v1138 = vsub.f32 0.0, %v1136
      %v1139 = vsub.f32 0.0, %v1137
      %v1140 = vmul.f32 %v1138, 1.442695
      %v1141 = vpow.pop %v1140
      %v1142 = vmul.f32 %v1139, 1.442695
      %v1143 = vpow.pop %v1142
      %v1144 = vadd.f32 %v1141, 1.0
      %v1145 = vadd.f32 %v1143, 1.0
      %v1146 = vrcp.pop %v1144
      %v1147 = vrcp.pop %v1145
      %v1148 = vmul.f32 %v1136, %v1146
      %v1149 = vmul.f32 %v1137, %v1147
      %1150 = vst [vmem:[%s251] sm:$0xff] %v1148
      %1151 = vst [vmem:[%s251 + $0x8] sm:$0xff] %v1149
      %p1152 = scmp.lt.s32.totalorder %s17, 1
      %s1153 = scalar_select %p1152, %s17, 1
      %s1154 = smul.addr %s1153, 2
      %s1155 = smul.addr %s1154, 8
      %s1156 = scalar_lea.vmem %s6, %s1155
      // Predicated region
      $region45: #{sppf_forward.1} parent=43 // pred_check
        %p1157 = pneg %p166
      $region46: #{sppf_forward.1} parent=43 // pred_check_branch
        %1159 = sbr.rel (%p1157) target = $region48
      $region47: #{sppf_forward.1} parent=43 // pred_region
        _
      $region48: #{sppf_forward.1} parent=43 // pred_fallthru
        _
    $region44: #{sppf_forward.1} parent=5 // pred_fallthru
      _
    %p1160 = scmp.le.s32.totalorder 2, %s12
    // Predicated region
    $region49: #{sppf_forward.1} parent=5 // pred_check
      %p1161 = pneg %p1160
    $region50: #{sppf_forward.1} parent=5 // pred_check_branch
      %1163 = sbr.rel (%p1161) target = $region52
    $region51: #{sppf_forward.1} parent=5 // pred_region
      %s1164 = ssub.s32 %s12, 2
      // Predicated region
      $region53: #{sppf_forward.1} parent=51 // pred_check
        %p1165 = pneg %p172
      $region54: #{sppf_forward.1} parent=51 // pred_check_branch
        %1167 = sbr.rel (%p1165) target = $region56
      $region55: #{sppf_forward.1} parent=51 // pred_region
        %p1168 = scmp.lt.s32.totalorder %s18, 1
        %s1169 = scalar_select %p1168, %s18, 1
        %s1170 = smul.addr %s1169, 2
        %s1171 = smul.addr %s1170, 8
        %s1172 = scalar_lea.vmem %s6, %s1171
      $region56: #{sppf_forward.1} parent=51 // pred_fallthru
        _
    $region52: #{sppf_forward.1} parent=5 // pred_fallthru
      _
  $region6: #{sppf_forward.1} parent=0 // loop_footer
    %s16 = sadd.s32 1, %s12
  $region7: #{sppf_forward.1} parent=0 // loop_footer_branch
    %11 = sbr.rel target = $region3
  $region8: #{sppf_forward.1} parent=0 // loop_exit
    _

</llo_original>
